<compile_context>
chip_gen: v5e
topology: v5e:2x2
jax: 0.10.0
libtpu: 0.0.40
codegen_flags: <defaults>
</compile_context>

<pallas_src>
from functools import partial

import jax
import jax.numpy as jnp
import numpy as np
from jax.experimental import pallas as pl
from jax.experimental.pallas import tpu as pltpu


# -----------------------------------------------------------------------------
# Pallas kernel: hoisted layer-0 projection + fully unrolled 2-layer recurrence
# + final FC, everything resident in VMEM (shapes are tiny), single grid point.
# -----------------------------------------------------------------------------
def lstm_fc_kernel(x_ref,      # (T*B, I)  TIME-MAJOR, flattened (row = t*B + b)
                   wih0_ref,   # (I, 4H)   layer-0 input weights (transposed)
                   whh0_ref,   # (H, 4H)   layer-0 hidden weights (transposed)
                   b0_ref,     # (1, 4H)   layer-0 combined bias (b_ih + b_hh)
                   w1_ref,     # (2H, 4H)  layer-1 packed weights [W_ih1^T; W_hh1^T]
                   b1_ref,     # (1, 4H)   layer-1 combined bias
                   fcw_ref,    # (H, C)    fc weight (transposed)
                   fcb_ref,    # (1, C)    fc bias
                   out_ref,    # (B, C)
                   *, batch):
    TB = x_ref.shape[0]
    H = whh0_ref.shape[0]
    B = batch
    T = TB // B

    # Hoist all weight / bias loads out of the (unrolled) time loop.
    whh0 = whh0_ref[...]
    w1 = w1_ref[...]
    b1b = jnp.broadcast_to(b1_ref[...], (B, 4 * H))   # broadcast ONCE, not per step

    # Layer-0 input projection hoisted out of the recurrence: a single
    # (T*B, I) x (I, 4H) MXU matmul with the bias folded in.  Time-major rows
    # mean each step below is a contiguous B-sublane slice.
    gx0 = (jnp.dot(x_ref[...], wih0_ref[...], preferred_element_type=jnp.float32)
           + b0_ref[...])                              # (T*B, 4H)

    def lstm_gates(gates, c):
        # Whole-vreg activations (4H == 128 lanes), then static lane slices.
        sig = jax.nn.sigmoid(gates)                    # (B, 4H) on the EUP
        th = jnp.tanh(gates)                           # (B, 4H) on the EUP
        i = sig[:, 0 * H:1 * H]
        f = sig[:, 1 * H:2 * H]
        g = th[:, 2 * H:3 * H]
        o = sig[:, 3 * H:4 * H]
        c_new = f * c + i * g
        h_new = o * jnp.tanh(c_new)
        return h_new, c_new

    zeros = jnp.zeros((B, H), jnp.float32)             # h/c init to zero (as in forward())
    h0, c0, h1, c1 = zeros, zeros, zeros, zeros

    # T is small and static: fully unroll so layer-1 work of step t can overlap
    # independent layer-0 work of step t+1 and there is no per-iter overhead.
    for t in range(T):
        # Layer 0: input projection already done; only the recurrent matmul here.
        # Static contiguous sublane slice (time-major layout).
        gx0_t = gx0[t * B:(t + 1) * B, :]              # (B, 4H)
        gates0 = gx0_t + jnp.dot(h0, whh0, preferred_element_type=jnp.float32)
        h0, c0 = lstm_gates(gates0, c0)
        # Layer 1: single fused matmul on concat([input, hidden]).
        xh = jnp.concatenate([h0, h1], axis=1)         # (B, 2H)
        gates1 = jnp.dot(xh, w1, preferred_element_type=jnp.float32) + b1b
        h1, c1 = lstm_gates(gates1, c1)

    # Final FC on the last hidden state of layer 1.
    # (B, C) output is tiny; lane-dense padding not worth it at this size.
    out_ref[...] = (jnp.dot(h1, fcw_ref[...], preferred_element_type=jnp.float32)
                    + fcb_ref[...])


# -----------------------------------------------------------------------------
# One-time parameter packing (outside the per-call path: no per-forward weight
# transposes / concats).
# -----------------------------------------------------------------------------
def pack_params(params):
    return {
        "wih0": jnp.transpose(params["w_ih_l0"]),                    # (I, 4H)
        "whh0": jnp.transpose(params["w_hh_l0"]),                    # (H, 4H)
        "b0": (params["b_ih_l0"] + params["b_hh_l0"])[None, :],      # (1, 4H)
        "w1": jnp.concatenate([jnp.transpose(params["w_ih_l1"]),
                               jnp.transpose(params["w_hh_l1"])],
                              axis=0),                               # (2H, 4H)
        "b1": (params["b_ih_l1"] + params["b_hh_l1"])[None, :],      # (1, 4H)
        "fcw": jnp.transpose(params["fc_w"]),                        # (H, C)
        "fcb": params["fc_b"][None, :],                              # (1, C)
    }


# -----------------------------------------------------------------------------
# Forward wrapper: one tiny time-major transpose (fused by XLA into the input
# copy), one pallas_call.
# -----------------------------------------------------------------------------
@jax.jit
def attack_predictor_forward(x, packed):
    """x: (B, T, I) batch-first float32; packed: pack_params(...) output.
    Returns (B, num_classes) float32."""
    B, T, I = x.shape
    C = packed["fcb"].shape[1]
    # Time-major flatten so the kernel's per-step slices of the hoisted
    # projection are contiguous sublane blocks (no strided sublane gathers).
    x2d = jnp.transpose(x, (1, 0, 2)).reshape(T * B, I)

    vmem = pl.BlockSpec(memory_space=pltpu.MemorySpace.VMEM)
    out = pl.pallas_call(
        partial(lstm_fc_kernel, batch=B),
        out_shape=jax.ShapeDtypeStruct((B, C), jnp.float32),
        in_specs=[vmem] * 8,
        out_specs=vmem,
    )(x2d, packed["wih0"], packed["whh0"], packed["b0"],
      packed["w1"], packed["b1"], packed["fcw"], packed["fcb"])
    return out


# -----------------------------------------------------------------------------
# Deterministic parameter init (PyTorch-style uniform(-1/sqrt(H), 1/sqrt(H))).
# -----------------------------------------------------------------------------
def init_params(key, input_size, hidden_size, num_classes):
    H = hidden_size
    bound = 1.0 / np.sqrt(H)
    names_shapes = [
        ("w_ih_l0", (4 * H, input_size)),
        ("w_hh_l0", (4 * H, H)),
        ("b_ih_l0", (4 * H,)),
        ("b_hh_l0", (4 * H,)),
        ("w_ih_l1", (4 * H, H)),
        ("w_hh_l1", (4 * H, H)),
        ("b_ih_l1", (4 * H,)),
        ("b_hh_l1", (4 * H,)),
        ("fc_w", (num_classes, H)),
        ("fc_b", (num_classes,)),
    ]
    params = {}
    keys = jax.random.split(key, len(names_shapes))
    for k, (name, shape) in zip(keys, names_shapes):
        params[name] = jax.random.uniform(
            k, shape, jnp.float32, minval=-bound, maxval=bound)
    return params


# -----------------------------------------------------------------------------
# Pure-JAX reference of the PyTorch forward (for validation).
# -----------------------------------------------------------------------------
def reference_forward(x, params, H):
    B = x.shape[0]

    def run_layer(inp, wih, whh, bih, bhh):
        h = jnp.zeros((B, H), jnp.float32)
        c = jnp.zeros((B, H), jnp.float32)
        outs = []
        for t in range(inp.shape[1]):
            gates = inp[:, t, :] @ wih.T + bih + h @ whh.T + bhh
            i = jax.nn.sigmoid(gates[:, 0 * H:1 * H])
            f = jax.nn.sigmoid(gates[:, 1 * H:2 * H])
            g = jnp.tanh(gates[:, 2 * H:3 * H])
            o = jax.nn.sigmoid(gates[:, 3 * H:4 * H])
            c = f * c + i * g
            h = o * jnp.tanh(c)
            outs.append(h)
        return jnp.stack(outs, axis=1)

    out0 = run_layer(x, params["w_ih_l0"], params["w_hh_l0"],
                     params["b_ih_l0"], params["b_hh_l0"])
    out1 = run_layer(out0, params["w_ih_l1"], params["w_hh_l1"],
                     params["b_ih_l1"], params["b_hh_l1"])
    return out1[:, -1, :] @ params["fc_w"].T + params["fc_b"]


if __name__ == "__main__":
    # AttackPredictor(input_size=16, hidden_size=32, num_layers=2, num_classes=8)
    batch, seq, input_size, hidden_size, num_classes = 4, 8, 16, 32, 8

    key = jax.random.PRNGKey(0)
    k_x, k_p = jax.random.split(key)
    x = jax.random.normal(k_x, (batch, seq, input_size), jnp.float32)
    params = init_params(k_p, input_size, hidden_size, num_classes)

    packed = jax.tree_util.tree_map(jax.block_until_ready, pack_params(params))

    out = attack_predictor_forward(x, packed)
    out = jax.block_until_ready(out)

    ref = reference_forward(x, params, hidden_size)
    np.testing.assert_allclose(np.asarray(out), np.asarray(ref),
                               rtol=1e-4, atol=1e-4)
    print("KERNEL_OK")
</pallas_src>

<mosaic_0001>
module attributes {stable_mosaic.version = 11 : i64} {
  func.func @lstm_fc_kernel(%arg0: memref<32x16xf32, #tpu.memory_space<vmem>>, %arg1: memref<16x128xf32, #tpu.memory_space<vmem>>, %arg2: memref<32x128xf32, #tpu.memory_space<vmem>>, %arg3: memref<1x128xf32, #tpu.memory_space<vmem>>, %arg4: memref<64x128xf32, #tpu.memory_space<vmem>>, %arg5: memref<1x128xf32, #tpu.memory_space<vmem>>, %arg6: memref<32x8xf32, #tpu.memory_space<vmem>>, %arg7: memref<1x8xf32, #tpu.memory_space<vmem>>, %arg8: memref<4x8xf32, #tpu.memory_space<vmem>>) attributes {dimension_semantics = [], scalar_prefetch = 0 : i64, scratch_operands = 0 : i64, tpu.core_type = #tpu.core_type<tc>} {
    %c0 = arith.constant 0 : index
    %c0_0 = arith.constant 0 : index
    %0 = vector.load %arg2[%c0, %c0_0] : memref<32x128xf32, #tpu.memory_space<vmem>>, vector<32x128xf32>
    %c0_1 = arith.constant 0 : index
    %c0_2 = arith.constant 0 : index
    %1 = vector.load %arg4[%c0_1, %c0_2] : memref<64x128xf32, #tpu.memory_space<vmem>>, vector<64x128xf32>
    %c0_3 = arith.constant 0 : index
    %c0_4 = arith.constant 0 : index
    %2 = vector.load %arg5[%c0_3, %c0_4] : memref<1x128xf32, #tpu.memory_space<vmem>>, vector<1x128xf32>
    %3 = vector.shape_cast %2 : vector<1x128xf32> to vector<1x128xf32>
    %4 = vector.broadcast %3 : vector<1x128xf32> to vector<4x128xf32>
    %c0_5 = arith.constant 0 : index
    %c0_6 = arith.constant 0 : index
    %5 = vector.load %arg0[%c0_5, %c0_6] : memref<32x16xf32, #tpu.memory_space<vmem>>, vector<32x16xf32>
    %c0_7 = arith.constant 0 : index
    %c0_8 = arith.constant 0 : index
    %6 = vector.load %arg1[%c0_7, %c0_8] : memref<16x128xf32, #tpu.memory_space<vmem>>, vector<16x128xf32>
    %cst = arith.constant dense<0.000000e+00> : vector<32x128xf32>
    %7 = tpu.matmul %5, %6, %cst {dimension_numbers = #tpu.dot_dimension_numbers<[1], [0], [0], [1], [0, 0, 1, 1], [], []>} : vector<32x16xf32>, vector<16x128xf32>, vector<32x128xf32> -> vector<32x128xf32>
    %c0_9 = arith.constant 0 : index
    %c0_10 = arith.constant 0 : index
    %8 = vector.load %arg3[%c0_9, %c0_10] : memref<1x128xf32, #tpu.memory_space<vmem>>, vector<1x128xf32>
    %9 = vector.broadcast %8 : vector<1x128xf32> to vector<32x128xf32>
    %10 = arith.addf %7, %9 : vector<32x128xf32>
    %cst_11 = arith.constant 0.000000e+00 : f32
    %11 = vector.broadcast %cst_11 : f32 to vector<4x32xf32>
    %12 = vector.extract_strided_slice %10 {offsets = [0, 0], sizes = [4, 128], strides = [1, 1]} : vector<32x128xf32> to vector<4x128xf32>
    %cst_12 = arith.constant dense<0.000000e+00> : vector<4x128xf32>
    %13 = tpu.matmul %11, %0, %cst_12 {dimension_numbers = #tpu.dot_dimension_numbers<[1], [0], [0], [1], [0, 0, 1, 1], [], []>} : vector<4x32xf32>, vector<32x128xf32>, vector<4x128xf32> -> vector<4x128xf32>
    %14 = arith.addf %12, %13 : vector<4x128xf32>
    %15 = arith.negf %14 : vector<4x128xf32>
    %16 = math.exp %15 : vector<4x128xf32>
    %cst_13 = arith.constant 1.000000e+00 : f32
    %17 = vector.broadcast %cst_13 : f32 to vector<4x128xf32>
    %18 = arith.addf %17, %16 : vector<4x128xf32>
    %19 = arith.divf %17, %18 : vector<4x128xf32>
    %20 = math.tanh %14 : vector<4x128xf32>
    %21 = vector.extract_strided_slice %19 {offsets = [0, 0], sizes = [4, 32], strides = [1, 1]} : vector<4x128xf32> to vector<4x32xf32>
    %22 = vector.extract_strided_slice %19 {offsets = [0, 32], sizes = [4, 32], strides = [1, 1]} : vector<4x128xf32> to vector<4x32xf32>
    %23 = vector.extract_strided_slice %20 {offsets = [0, 64], sizes = [4, 32], strides = [1, 1]} : vector<4x128xf32> to vector<4x32xf32>
    %24 = vector.extract_strided_slice %19 {offsets = [0, 96], sizes = [4, 32], strides = [1, 1]} : vector<4x128xf32> to vector<4x32xf32>
    %25 = arith.mulf %22, %11 : vector<4x32xf32>
    %26 = arith.mulf %21, %23 : vector<4x32xf32>
    %27 = arith.addf %25, %26 : vector<4x32xf32>
    %28 = math.tanh %27 : vector<4x32xf32>
    %29 = arith.mulf %24, %28 : vector<4x32xf32>
    %30 = tpu.concatenate %29, %11 in 1 : vector<4x32xf32>, vector<4x32xf32> -> vector<4x64xf32>
    %cst_14 = arith.constant dense<0.000000e+00> : vector<4x128xf32>
    %31 = tpu.matmul %30, %1, %cst_14 {dimension_numbers = #tpu.dot_dimension_numbers<[1], [0], [0], [1], [0, 0, 1, 1], [], []>} : vector<4x64xf32>, vector<64x128xf32>, vector<4x128xf32> -> vector<4x128xf32>
    %32 = arith.addf %31, %4 : vector<4x128xf32>
    %33 = arith.negf %32 : vector<4x128xf32>
    %34 = math.exp %33 : vector<4x128xf32>
    %cst_15 = arith.constant 1.000000e+00 : f32
    %35 = vector.broadcast %cst_15 : f32 to vector<4x128xf32>
    %36 = arith.addf %35, %34 : vector<4x128xf32>
    %37 = arith.divf %35, %36 : vector<4x128xf32>
    %38 = math.tanh %32 : vector<4x128xf32>
    %39 = vector.extract_strided_slice %37 {offsets = [0, 0], sizes = [4, 32], strides = [1, 1]} : vector<4x128xf32> to vector<4x32xf32>
    %40 = vector.extract_strided_slice %37 {offsets = [0, 32], sizes = [4, 32], strides = [1, 1]} : vector<4x128xf32> to vector<4x32xf32>
    %41 = vector.extract_strided_slice %38 {offsets = [0, 64], sizes = [4, 32], strides = [1, 1]} : vector<4x128xf32> to vector<4x32xf32>
    %42 = vector.extract_strided_slice %37 {offsets = [0, 96], sizes = [4, 32], strides = [1, 1]} : vector<4x128xf32> to vector<4x32xf32>
    %43 = arith.mulf %40, %11 : vector<4x32xf32>
    %44 = arith.mulf %39, %41 : vector<4x32xf32>
    %45 = arith.addf %43, %44 : vector<4x32xf32>
    %46 = math.tanh %45 : vector<4x32xf32>
    %47 = arith.mulf %42, %46 : vector<4x32xf32>
    %48 = vector.extract_strided_slice %10 {offsets = [4, 0], sizes = [4, 128], strides = [1, 1]} : vector<32x128xf32> to vector<4x128xf32>
    %cst_16 = arith.constant dense<0.000000e+00> : vector<4x128xf32>
    %49 = tpu.matmul %29, %0, %cst_16 {dimension_numbers = #tpu.dot_dimension_numbers<[1], [0], [0], [1], [0, 0, 1, 1], [], []>} : vector<4x32xf32>, vector<32x128xf32>, vector<4x128xf32> -> vector<4x128xf32>
    %50 = arith.addf %48, %49 : vector<4x128xf32>
    %51 = arith.negf %50 : vector<4x128xf32>
    %52 = math.exp %51 : vector<4x128xf32>
    %cst_17 = arith.constant 1.000000e+00 : f32
    %53 = vector.broadcast %cst_17 : f32 to vector<4x128xf32>
    %54 = arith.addf %53, %52 : vector<4x128xf32>
    %55 = arith.divf %53, %54 : vector<4x128xf32>
    %56 = math.tanh %50 : vector<4x128xf32>
    %57 = vector.extract_strided_slice %55 {offsets = [0, 0], sizes = [4, 32], strides = [1, 1]} : vector<4x128xf32> to vector<4x32xf32>
    %58 = vector.extract_strided_slice %55 {offsets = [0, 32], sizes = [4, 32], strides = [1, 1]} : vector<4x128xf32> to vector<4x32xf32>
    %59 = vector.extract_strided_slice %56 {offsets = [0, 64], sizes = [4, 32], strides = [1, 1]} : vector<4x128xf32> to vector<4x32xf32>
    %60 = vector.extract_strided_slice %55 {offsets = [0, 96], sizes = [4, 32], strides = [1, 1]} : vector<4x128xf32> to vector<4x32xf32>
    %61 = arith.mulf %58, %27 : vector<4x32xf32>
    %62 = arith.mulf %57, %59 : vector<4x32xf32>
    %63 = arith.addf %61, %62 : vector<4x32xf32>
    %64 = math.tanh %63 : vector<4x32xf32>
    %65 = arith.mulf %60, %64 : vector<4x32xf32>
    %66 = tpu.concatenate %65, %47 in 1 : vector<4x32xf32>, vector<4x32xf32> -> vector<4x64xf32>
    %cst_18 = arith.constant dense<0.000000e+00> : vector<4x128xf32>
    %67 = tpu.matmul %66, %1, %cst_18 {dimension_numbers = #tpu.dot_dimension_numbers<[1], [0], [0], [1], [0, 0, 1, 1], [], []>} : vector<4x64xf32>, vector<64x128xf32>, vector<4x128xf32> -> vector<4x128xf32>
    %68 = arith.addf %67, %4 : vector<4x128xf32>
    %69 = arith.negf %68 : vector<4x128xf32>
    %70 = math.exp %69 : vector<4x128xf32>
    %cst_19 = arith.constant 1.000000e+00 : f32
    %71 = vector.broadcast %cst_19 : f32 to vector<4x128xf32>
    %72 = arith.addf %71, %70 : vector<4x128xf32>
    %73 = arith.divf %71, %72 : vector<4x128xf32>
    %74 = math.tanh %68 : vector<4x128xf32>
    %75 = vector.extract_strided_slice %73 {offsets = [0, 0], sizes = [4, 32], strides = [1, 1]} : vector<4x128xf32> to vector<4x32xf32>
    %76 = vector.extract_strided_slice %73 {offsets = [0, 32], sizes = [4, 32], strides = [1, 1]} : vector<4x128xf32> to vector<4x32xf32>
    %77 = vector.extract_strided_slice %74 {offsets = [0, 64], sizes = [4, 32], strides = [1, 1]} : vector<4x128xf32> to vector<4x32xf32>
    %78 = vector.extract_strided_slice %73 {offsets = [0, 96], sizes = [4, 32], strides = [1, 1]} : vector<4x128xf32> to vector<4x32xf32>
    %79 = arith.mulf %76, %45 : vector<4x32xf32>
    %80 = arith.mulf %75, %77 : vector<4x32xf32>
    %81 = arith.addf %79, %80 : vector<4x32xf32>
    %82 = math.tanh %81 : vector<4x32xf32>
    %83 = arith.mulf %78, %82 : vector<4x32xf32>
    %84 = vector.extract_strided_slice %10 {offsets = [8, 0], sizes = [4, 128], strides = [1, 1]} : vector<32x128xf32> to vector<4x128xf32>
    %cst_20 = arith.constant dense<0.000000e+00> : vector<4x128xf32>
    %85 = tpu.matmul %65, %0, %cst_20 {dimension_numbers = #tpu.dot_dimension_numbers<[1], [0], [0], [1], [0, 0, 1, 1], [], []>} : vector<4x32xf32>, vector<32x128xf32>, vector<4x128xf32> -> vector<4x128xf32>
    %86 = arith.addf %84, %85 : vector<4x128xf32>
    %87 = arith.negf %86 : vector<4x128xf32>
    %88 = math.exp %87 : vector<4x128xf32>
    %cst_21 = arith.constant 1.000000e+00 : f32
    %89 = vector.broadcast %cst_21 : f32 to vector<4x128xf32>
    %90 = arith.addf %89, %88 : vector<4x128xf32>
    %91 = arith.divf %89, %90 : vector<4x128xf32>
    %92 = math.tanh %86 : vector<4x128xf32>
    %93 = vector.extract_strided_slice %91 {offsets = [0, 0], sizes = [4, 32], strides = [1, 1]} : vector<4x128xf32> to vector<4x32xf32>
    %94 = vector.extract_strided_slice %91 {offsets = [0, 32], sizes = [4, 32], strides = [1, 1]} : vector<4x128xf32> to vector<4x32xf32>
    %95 = vector.extract_strided_slice %92 {offsets = [0, 64], sizes = [4, 32], strides = [1, 1]} : vector<4x128xf32> to vector<4x32xf32>
    %96 = vector.extract_strided_slice %91 {offsets = [0, 96], sizes = [4, 32], strides = [1, 1]} : vector<4x128xf32> to vector<4x32xf32>
    %97 = arith.mulf %94, %63 : vector<4x32xf32>
    %98 = arith.mulf %93, %95 : vector<4x32xf32>
    %99 = arith.addf %97, %98 : vector<4x32xf32>
    %100 = math.tanh %99 : vector<4x32xf32>
    %101 = arith.mulf %96, %100 : vector<4x32xf32>
    %102 = tpu.concatenate %101, %83 in 1 : vector<4x32xf32>, vector<4x32xf32> -> vector<4x64xf32>
    %cst_22 = arith.constant dense<0.000000e+00> : vector<4x128xf32>
    %103 = tpu.matmul %102, %1, %cst_22 {dimension_numbers = #tpu.dot_dimension_numbers<[1], [0], [0], [1], [0, 0, 1, 1], [], []>} : vector<4x64xf32>, vector<64x128xf32>, vector<4x128xf32> -> vector<4x128xf32>
    %104 = arith.addf %103, %4 : vector<4x128xf32>
    %105 = arith.negf %104 : vector<4x128xf32>
    %106 = math.exp %105 : vector<4x128xf32>
    %cst_23 = arith.constant 1.000000e+00 : f32
    %107 = vector.broadcast %cst_23 : f32 to vector<4x128xf32>
    %108 = arith.addf %107, %106 : vector<4x128xf32>
    %109 = arith.divf %107, %108 : vector<4x128xf32>
    %110 = math.tanh %104 : vector<4x128xf32>
    %111 = vector.extract_strided_slice %109 {offsets = [0, 0], sizes = [4, 32], strides = [1, 1]} : vector<4x128xf32> to vector<4x32xf32>
    %112 = vector.extract_strided_slice %109 {offsets = [0, 32], sizes = [4, 32], strides = [1, 1]} : vector<4x128xf32> to vector<4x32xf32>
    %113 = vector.extract_strided_slice %110 {offsets = [0, 64], sizes = [4, 32], strides = [1, 1]} : vector<4x128xf32> to vector<4x32xf32>
    %114 = vector.extract_strided_slice %109 {offsets = [0, 96], sizes = [4, 32], strides = [1, 1]} : vector<4x128xf32> to vector<4x32xf32>
    %115 = arith.mulf %112, %81 : vector<4x32xf32>
    %116 = arith.mulf %111, %113 : vector<4x32xf32>
    %117 = arith.addf %115, %116 : vector<4x32xf32>
    %118 = math.tanh %117 : vector<4x32xf32>
    %119 = arith.mulf %114, %118 : vector<4x32xf32>
    %120 = vector.extract_strided_slice %10 {offsets = [12, 0], sizes = [4, 128], strides = [1, 1]} : vector<32x128xf32> to vector<4x128xf32>
    %cst_24 = arith.constant dense<0.000000e+00> : vector<4x128xf32>
    %121 = tpu.matmul %101, %0, %cst_24 {dimension_numbers = #tpu.dot_dimension_numbers<[1], [0], [0], [1], [0, 0, 1, 1], [], []>} : vector<4x32xf32>, vector<32x128xf32>, vector<4x128xf32> -> vector<4x128xf32>
    %122 = arith.addf %120, %121 : vector<4x128xf32>
    %123 = arith.negf %122 : vector<4x128xf32>
    %124 = math.exp %123 : vector<4x128xf32>
    %cst_25 = arith.constant 1.000000e+00 : f32
    %125 = vector.broadcast %cst_25 : f32 to vector<4x128xf32>
    %126 = arith.addf %125, %124 : vector<4x128xf32>
    %127 = arith.divf %125, %126 : vector<4x128xf32>
    %128 = math.tanh %122 : vector<4x128xf32>
    %129 = vector.extract_strided_slice %127 {offsets = [0, 0], sizes = [4, 32], strides = [1, 1]} : vector<4x128xf32> to vector<4x32xf32>
    %130 = vector.extract_strided_slice %127 {offsets = [0, 32], sizes = [4, 32], strides = [1, 1]} : vector<4x128xf32> to vector<4x32xf32>
    %131 = vector.extract_strided_slice %128 {offsets = [0, 64], sizes = [4, 32], strides = [1, 1]} : vector<4x128xf32> to vector<4x32xf32>
    %132 = vector.extract_strided_slice %127 {offsets = [0, 96], sizes = [4, 32], strides = [1, 1]} : vector<4x128xf32> to vector<4x32xf32>
    %133 = arith.mulf %130, %99 : vector<4x32xf32>
    %134 = arith.mulf %129, %131 : vector<4x32xf32>
    %135 = arith.addf %133, %134 : vector<4x32xf32>
    %136 = math.tanh %135 : vector<4x32xf32>
    %137 = arith.mulf %132, %136 : vector<4x32xf32>
    %138 = tpu.concatenate %137, %119 in 1 : vector<4x32xf32>, vector<4x32xf32> -> vector<4x64xf32>
    %cst_26 = arith.constant dense<0.000000e+00> : vector<4x128xf32>
    %139 = tpu.matmul %138, %1, %cst_26 {dimension_numbers = #tpu.dot_dimension_numbers<[1], [0], [0], [1], [0, 0, 1, 1], [], []>} : vector<4x64xf32>, vector<64x128xf32>, vector<4x128xf32> -> vector<4x128xf32>
    %140 = arith.addf %139, %4 : vector<4x128xf32>
    %141 = arith.negf %140 : vector<4x128xf32>
    %142 = math.exp %141 : vector<4x128xf32>
    %cst_27 = arith.constant 1.000000e+00 : f32
    %143 = vector.broadcast %cst_27 : f32 to vector<4x128xf32>
    %144 = arith.addf %143, %142 : vector<4x128xf32>
    %145 = arith.divf %143, %144 : vector<4x128xf32>
    %146 = math.tanh %140 : vector<4x128xf32>
    %147 = vector.extract_strided_slice %145 {offsets = [0, 0], sizes = [4, 32], strides = [1, 1]} : vector<4x128xf32> to vector<4x32xf32>
    %148 = vector.extract_strided_slice %145 {offsets = [0, 32], sizes = [4, 32], strides = [1, 1]} : vector<4x128xf32> to vector<4x32xf32>
    %149 = vector.extract_strided_slice %146 {offsets = [0, 64], sizes = [4, 32], strides = [1, 1]} : vector<4x128xf32> to vector<4x32xf32>
    %150 = vector.extract_strided_slice %145 {offsets = [0, 96], sizes = [4, 32], strides = [1, 1]} : vector<4x128xf32> to vector<4x32xf32>
    %151 = arith.mulf %148, %117 : vector<4x32xf32>
    %152 = arith.mulf %147, %149 : vector<4x32xf32>
    %153 = arith.addf %151, %152 : vector<4x32xf32>
    %154 = math.tanh %153 : vector<4x32xf32>
    %155 = arith.mulf %150, %154 : vector<4x32xf32>
    %156 = vector.extract_strided_slice %10 {offsets = [16, 0], sizes = [4, 128], strides = [1, 1]} : vector<32x128xf32> to vector<4x128xf32>
    %cst_28 = arith.constant dense<0.000000e+00> : vector<4x128xf32>
    %157 = tpu.matmul %137, %0, %cst_28 {dimension_numbers = #tpu.dot_dimension_numbers<[1], [0], [0], [1], [0, 0, 1, 1], [], []>} : vector<4x32xf32>, vector<32x128xf32>, vector<4x128xf32> -> vector<4x128xf32>
    %158 = arith.addf %156, %157 : vector<4x128xf32>
    %159 = arith.negf %158 : vector<4x128xf32>
    %160 = math.exp %159 : vector<4x128xf32>
    %cst_29 = arith.constant 1.000000e+00 : f32
    %161 = vector.broadcast %cst_29 : f32 to vector<4x128xf32>
    %162 = arith.addf %161, %160 : vector<4x128xf32>
    %163 = arith.divf %161, %162 : vector<4x128xf32>
    %164 = math.tanh %158 : vector<4x128xf32>
    %165 = vector.extract_strided_slice %163 {offsets = [0, 0], sizes = [4, 32], strides = [1, 1]} : vector<4x128xf32> to vector<4x32xf32>
    %166 = vector.extract_strided_slice %163 {offsets = [0, 32], sizes = [4, 32], strides = [1, 1]} : vector<4x128xf32> to vector<4x32xf32>
    %167 = vector.extract_strided_slice %164 {offsets = [0, 64], sizes = [4, 32], strides = [1, 1]} : vector<4x128xf32> to vector<4x32xf32>
    %168 = vector.extract_strided_slice %163 {offsets = [0, 96], sizes = [4, 32], strides = [1, 1]} : vector<4x128xf32> to vector<4x32xf32>
    %169 = arith.mulf %166, %135 : vector<4x32xf32>
    %170 = arith.mulf %165, %167 : vector<4x32xf32>
    %171 = arith.addf %169, %170 : vector<4x32xf32>
    %172 = math.tanh %171 : vector<4x32xf32>
    %173 = arith.mulf %168, %172 : vector<4x32xf32>
    %174 = tpu.concatenate %173, %155 in 1 : vector<4x32xf32>, vector<4x32xf32> -> vector<4x64xf32>
    %cst_30 = arith.constant dense<0.000000e+00> : vector<4x128xf32>
    %175 = tpu.matmul %174, %1, %cst_30 {dimension_numbers = #tpu.dot_dimension_numbers<[1], [0], [0], [1], [0, 0, 1, 1], [], []>} : vector<4x64xf32>, vector<64x128xf32>, vector<4x128xf32> -> vector<4x128xf32>
    %176 = arith.addf %175, %4 : vector<4x128xf32>
    %177 = arith.negf %176 : vector<4x128xf32>
    %178 = math.exp %177 : vector<4x128xf32>
    %cst_31 = arith.constant 1.000000e+00 : f32
    %179 = vector.broadcast %cst_31 : f32 to vector<4x128xf32>
    %180 = arith.addf %179, %178 : vector<4x128xf32>
    %181 = arith.divf %179, %180 : vector<4x128xf32>
    %182 = math.tanh %176 : vector<4x128xf32>
    %183 = vector.extract_strided_slice %181 {offsets = [0, 0], sizes = [4, 32], strides = [1, 1]} : vector<4x128xf32> to vector<4x32xf32>
    %184 = vector.extract_strided_slice %181 {offsets = [0, 32], sizes = [4, 32], strides = [1, 1]} : vector<4x128xf32> to vector<4x32xf32>
    %185 = vector.extract_strided_slice %182 {offsets = [0, 64], sizes = [4, 32], strides = [1, 1]} : vector<4x128xf32> to vector<4x32xf32>
    %186 = vector.extract_strided_slice %181 {offsets = [0, 96], sizes = [4, 32], strides = [1, 1]} : vector<4x128xf32> to vector<4x32xf32>
    %187 = arith.mulf %184, %153 : vector<4x32xf32>
    %188 = arith.mulf %183, %185 : vector<4x32xf32>
    %189 = arith.addf %187, %188 : vector<4x32xf32>
    %190 = math.tanh %189 : vector<4x32xf32>
    %191 = arith.mulf %186, %190 : vector<4x32xf32>
    %192 = vector.extract_strided_slice %10 {offsets = [20, 0], sizes = [4, 128], strides = [1, 1]} : vector<32x128xf32> to vector<4x128xf32>
    %cst_32 = arith.constant dense<0.000000e+00> : vector<4x128xf32>
    %193 = tpu.matmul %173, %0, %cst_32 {dimension_numbers = #tpu.dot_dimension_numbers<[1], [0], [0], [1], [0, 0, 1, 1], [], []>} : vector<4x32xf32>, vector<32x128xf32>, vector<4x128xf32> -> vector<4x128xf32>
    %194 = arith.addf %192, %193 : vector<4x128xf32>
    %195 = arith.negf %194 : vector<4x128xf32>
    %196 = math.exp %195 : vector<4x128xf32>
    %cst_33 = arith.constant 1.000000e+00 : f32
    %197 = vector.broadcast %cst_33 : f32 to vector<4x128xf32>
    %198 = arith.addf %197, %196 : vector<4x128xf32>
    %199 = arith.divf %197, %198 : vector<4x128xf32>
    %200 = math.tanh %194 : vector<4x128xf32>
    %201 = vector.extract_strided_slice %199 {offsets = [0, 0], sizes = [4, 32], strides = [1, 1]} : vector<4x128xf32> to vector<4x32xf32>
    %202 = vector.extract_strided_slice %199 {offsets = [0, 32], sizes = [4, 32], strides = [1, 1]} : vector<4x128xf32> to vector<4x32xf32>
    %203 = vector.extract_strided_slice %200 {offsets = [0, 64], sizes = [4, 32], strides = [1, 1]} : vector<4x128xf32> to vector<4x32xf32>
    %204 = vector.extract_strided_slice %199 {offsets = [0, 96], sizes = [4, 32], strides = [1, 1]} : vector<4x128xf32> to vector<4x32xf32>
    %205 = arith.mulf %202, %171 : vector<4x32xf32>
    %206 = arith.mulf %201, %203 : vector<4x32xf32>
    %207 = arith.addf %205, %206 : vector<4x32xf32>
    %208 = math.tanh %207 : vector<4x32xf32>
    %209 = arith.mulf %204, %208 : vector<4x32xf32>
    %210 = tpu.concatenate %209, %191 in 1 : vector<4x32xf32>, vector<4x32xf32> -> vector<4x64xf32>
    %cst_34 = arith.constant dense<0.000000e+00> : vector<4x128xf32>
    %211 = tpu.matmul %210, %1, %cst_34 {dimension_numbers = #tpu.dot_dimension_numbers<[1], [0], [0], [1], [0, 0, 1, 1], [], []>} : vector<4x64xf32>, vector<64x128xf32>, vector<4x128xf32> -> vector<4x128xf32>
    %212 = arith.addf %211, %4 : vector<4x128xf32>
    %213 = arith.negf %212 : vector<4x128xf32>
    %214 = math.exp %213 : vector<4x128xf32>
    %cst_35 = arith.constant 1.000000e+00 : f32
    %215 = vector.broadcast %cst_35 : f32 to vector<4x128xf32>
    %216 = arith.addf %215, %214 : vector<4x128xf32>
    %217 = arith.divf %215, %216 : vector<4x128xf32>
    %218 = math.tanh %212 : vector<4x128xf32>
    %219 = vector.extract_strided_slice %217 {offsets = [0, 0], sizes = [4, 32], strides = [1, 1]} : vector<4x128xf32> to vector<4x32xf32>
    %220 = vector.extract_strided_slice %217 {offsets = [0, 32], sizes = [4, 32], strides = [1, 1]} : vector<4x128xf32> to vector<4x32xf32>
    %221 = vector.extract_strided_slice %218 {offsets = [0, 64], sizes = [4, 32], strides = [1, 1]} : vector<4x128xf32> to vector<4x32xf32>
    %222 = vector.extract_strided_slice %217 {offsets = [0, 96], sizes = [4, 32], strides = [1, 1]} : vector<4x128xf32> to vector<4x32xf32>
    %223 = arith.mulf %220, %189 : vector<4x32xf32>
    %224 = arith.mulf %219, %221 : vector<4x32xf32>
    %225 = arith.addf %223, %224 : vector<4x32xf32>
    %226 = math.tanh %225 : vector<4x32xf32>
    %227 = arith.mulf %222, %226 : vector<4x32xf32>
    %228 = vector.extract_strided_slice %10 {offsets = [24, 0], sizes = [4, 128], strides = [1, 1]} : vector<32x128xf32> to vector<4x128xf32>
    %cst_36 = arith.constant dense<0.000000e+00> : vector<4x128xf32>
    %229 = tpu.matmul %209, %0, %cst_36 {dimension_numbers = #tpu.dot_dimension_numbers<[1], [0], [0], [1], [0, 0, 1, 1], [], []>} : vector<4x32xf32>, vector<32x128xf32>, vector<4x128xf32> -> vector<4x128xf32>
    %230 = arith.addf %228, %229 : vector<4x128xf32>
    %231 = arith.negf %230 : vector<4x128xf32>
    %232 = math.exp %231 : vector<4x128xf32>
    %cst_37 = arith.constant 1.000000e+00 : f32
    %233 = vector.broadcast %cst_37 : f32 to vector<4x128xf32>
    %234 = arith.addf %233, %232 : vector<4x128xf32>
    %235 = arith.divf %233, %234 : vector<4x128xf32>
    %236 = math.tanh %230 : vector<4x128xf32>
    %237 = vector.extract_strided_slice %235 {offsets = [0, 0], sizes = [4, 32], strides = [1, 1]} : vector<4x128xf32> to vector<4x32xf32>
    %238 = vector.extract_strided_slice %235 {offsets = [0, 32], sizes = [4, 32], strides = [1, 1]} : vector<4x128xf32> to vector<4x32xf32>
    %239 = vector.extract_strided_slice %236 {offsets = [0, 64], sizes = [4, 32], strides = [1, 1]} : vector<4x128xf32> to vector<4x32xf32>
    %240 = vector.extract_strided_slice %235 {offsets = [0, 96], sizes = [4, 32], strides = [1, 1]} : vector<4x128xf32> to vector<4x32xf32>
    %241 = arith.mulf %238, %207 : vector<4x32xf32>
    %242 = arith.mulf %237, %239 : vector<4x32xf32>
    %243 = arith.addf %241, %242 : vector<4x32xf32>
    %244 = math.tanh %243 : vector<4x32xf32>
    %245 = arith.mulf %240, %244 : vector<4x32xf32>
    %246 = tpu.concatenate %245, %227 in 1 : vector<4x32xf32>, vector<4x32xf32> -> vector<4x64xf32>
    %cst_38 = arith.constant dense<0.000000e+00> : vector<4x128xf32>
    %247 = tpu.matmul %246, %1, %cst_38 {dimension_numbers = #tpu.dot_dimension_numbers<[1], [0], [0], [1], [0, 0, 1, 1], [], []>} : vector<4x64xf32>, vector<64x128xf32>, vector<4x128xf32> -> vector<4x128xf32>
    %248 = arith.addf %247, %4 : vector<4x128xf32>
    %249 = arith.negf %248 : vector<4x128xf32>
    %250 = math.exp %249 : vector<4x128xf32>
    %cst_39 = arith.constant 1.000000e+00 : f32
    %251 = vector.broadcast %cst_39 : f32 to vector<4x128xf32>
    %252 = arith.addf %251, %250 : vector<4x128xf32>
    %253 = arith.divf %251, %252 : vector<4x128xf32>
    %254 = math.tanh %248 : vector<4x128xf32>
    %255 = vector.extract_strided_slice %253 {offsets = [0, 0], sizes = [4, 32], strides = [1, 1]} : vector<4x128xf32> to vector<4x32xf32>
    %256 = vector.extract_strided_slice %253 {offsets = [0, 32], sizes = [4, 32], strides = [1, 1]} : vector<4x128xf32> to vector<4x32xf32>
    %257 = vector.extract_strided_slice %254 {offsets = [0, 64], sizes = [4, 32], strides = [1, 1]} : vector<4x128xf32> to vector<4x32xf32>
    %258 = vector.extract_strided_slice %253 {offsets = [0, 96], sizes = [4, 32], strides = [1, 1]} : vector<4x128xf32> to vector<4x32xf32>
    %259 = arith.mulf %256, %225 : vector<4x32xf32>
    %260 = arith.mulf %255, %257 : vector<4x32xf32>
    %261 = arith.addf %259, %260 : vector<4x32xf32>
    %262 = math.tanh %261 : vector<4x32xf32>
    %263 = arith.mulf %258, %262 : vector<4x32xf32>
    %264 = vector.extract_strided_slice %10 {offsets = [28, 0], sizes = [4, 128], strides = [1, 1]} : vector<32x128xf32> to vector<4x128xf32>
    %cst_40 = arith.constant dense<0.000000e+00> : vector<4x128xf32>
    %265 = tpu.matmul %245, %0, %cst_40 {dimension_numbers = #tpu.dot_dimension_numbers<[1], [0], [0], [1], [0, 0, 1, 1], [], []>} : vector<4x32xf32>, vector<32x128xf32>, vector<4x128xf32> -> vector<4x128xf32>
    %266 = arith.addf %264, %265 : vector<4x128xf32>
    %267 = arith.negf %266 : vector<4x128xf32>
    %268 = math.exp %267 : vector<4x128xf32>
    %cst_41 = arith.constant 1.000000e+00 : f32
    %269 = vector.broadcast %cst_41 : f32 to vector<4x128xf32>
    %270 = arith.addf %269, %268 : vector<4x128xf32>
    %271 = arith.divf %269, %270 : vector<4x128xf32>
    %272 = math.tanh %266 : vector<4x128xf32>
    %273 = vector.extract_strided_slice %271 {offsets = [0, 0], sizes = [4, 32], strides = [1, 1]} : vector<4x128xf32> to vector<4x32xf32>
    %274 = vector.extract_strided_slice %271 {offsets = [0, 32], sizes = [4, 32], strides = [1, 1]} : vector<4x128xf32> to vector<4x32xf32>
    %275 = vector.extract_strided_slice %272 {offsets = [0, 64], sizes = [4, 32], strides = [1, 1]} : vector<4x128xf32> to vector<4x32xf32>
    %276 = vector.extract_strided_slice %271 {offsets = [0, 96], sizes = [4, 32], strides = [1, 1]} : vector<4x128xf32> to vector<4x32xf32>
    %277 = arith.mulf %274, %243 : vector<4x32xf32>
    %278 = arith.mulf %273, %275 : vector<4x32xf32>
    %279 = arith.addf %277, %278 : vector<4x32xf32>
    %280 = math.tanh %279 : vector<4x32xf32>
    %281 = arith.mulf %276, %280 : vector<4x32xf32>
    %282 = tpu.concatenate %281, %263 in 1 : vector<4x32xf32>, vector<4x32xf32> -> vector<4x64xf32>
    %cst_42 = arith.constant dense<0.000000e+00> : vector<4x128xf32>
    %283 = tpu.matmul %282, %1, %cst_42 {dimension_numbers = #tpu.dot_dimension_numbers<[1], [0], [0], [1], [0, 0, 1, 1], [], []>} : vector<4x64xf32>, vector<64x128xf32>, vector<4x128xf32> -> vector<4x128xf32>
    %284 = arith.addf %283, %4 : vector<4x128xf32>
    %285 = arith.negf %284 : vector<4x128xf32>
    %286 = math.exp %285 : vector<4x128xf32>
    %cst_43 = arith.constant 1.000000e+00 : f32
    %287 = vector.broadcast %cst_43 : f32 to vector<4x128xf32>
    %288 = arith.addf %287, %286 : vector<4x128xf32>
    %289 = arith.divf %287, %288 : vector<4x128xf32>
    %290 = math.tanh %284 : vector<4x128xf32>
    %291 = vector.extract_strided_slice %289 {offsets = [0, 0], sizes = [4, 32], strides = [1, 1]} : vector<4x128xf32> to vector<4x32xf32>
    %292 = vector.extract_strided_slice %289 {offsets = [0, 32], sizes = [4, 32], strides = [1, 1]} : vector<4x128xf32> to vector<4x32xf32>
    %293 = vector.extract_strided_slice %290 {offsets = [0, 64], sizes = [4, 32], strides = [1, 1]} : vector<4x128xf32> to vector<4x32xf32>
    %294 = vector.extract_strided_slice %289 {offsets = [0, 96], sizes = [4, 32], strides = [1, 1]} : vector<4x128xf32> to vector<4x32xf32>
    %295 = arith.mulf %292, %261 : vector<4x32xf32>
    %296 = arith.mulf %291, %293 : vector<4x32xf32>
    %297 = arith.addf %295, %296 : vector<4x32xf32>
    %298 = math.tanh %297 : vector<4x32xf32>
    %299 = arith.mulf %294, %298 : vector<4x32xf32>
    %c0_44 = arith.constant 0 : index
    %c0_45 = arith.constant 0 : index
    %300 = vector.load %arg6[%c0_44, %c0_45] : memref<32x8xf32, #tpu.memory_space<vmem>>, vector<32x8xf32>
    %cst_46 = arith.constant dense<0.000000e+00> : vector<4x8xf32>
    %301 = tpu.matmul %299, %300, %cst_46 {dimension_numbers = #tpu.dot_dimension_numbers<[1], [0], [0], [1], [0, 0, 1, 1], [], []>} : vector<4x32xf32>, vector<32x8xf32>, vector<4x8xf32> -> vector<4x8xf32>
    %c0_47 = arith.constant 0 : index
    %c0_48 = arith.constant 0 : index
    %302 = vector.load %arg7[%c0_47, %c0_48] : memref<1x8xf32, #tpu.memory_space<vmem>>, vector<1x8xf32>
    %303 = vector.broadcast %302 : vector<1x8xf32> to vector<4x8xf32>
    %304 = arith.addf %301, %303 : vector<4x8xf32>
    %c0_49 = arith.constant 0 : index
    %c0_50 = arith.constant 0 : index
    %305 = vector.load %arg8[%c0_49, %c0_50] : memref<4x8xf32, #tpu.memory_space<vmem>>, vector<4x8xf32>
    tpu.vector_store %arg8[%c0_49, %c0_50], %304 {strides = array<i32>} : memref<4x8xf32, #tpu.memory_space<vmem>>, vector<4x8xf32>,
    return
  }
}

</mosaic_0001>

<llo_original>
// kernel: attack_predictor_forward.1
$region0: #{attack_predictor_forward.1}
  #allocation0 [shape = 'u32[]', space=smem, size = 0x4, offset = 0x4, fixed_abs, tag = 'smem constant byte address 0x4 - core index']
  #allocation1 [shape = 'u32[72,128]{1,0:T(1,128)}', space=vmem, size = 0x9000, scoped, tag = 'internal scratch']
  %s0 = inlined_call_operand.vmem [shape: f32[32,16], index: 0, kind: input, shape index: {}]
  %s1 = inlined_call_operand.hbm [shape: f32[16,128], index: 1, kind: input, shape index: {}]
  %s2 = inlined_call_operand.vmem [shape: f32[32,128], index: 2, kind: input, shape index: {}]
  %s3 = inlined_call_operand.vmem [shape: f32[1,128], index: 3, kind: input, shape index: {}]
  %s4 = inlined_call_operand.vmem [shape: f32[64,128], index: 4, kind: input, shape index: {}]
  %s5 = inlined_call_operand.vmem [shape: f32[1,128], index: 5, kind: input, shape index: {}]
  %s6 = inlined_call_operand.vmem [shape: f32[32,8], index: 6, kind: input, shape index: {}]
  %s7 = inlined_call_operand.vmem [shape: f32[1,8], index: 7, kind: input, shape index: {}]
  %s8 = inlined_call_operand.hbm [shape: f32[4,8], index: 8, kind: output, shape index: {}]
  %s9 = sld [smem:[#allocation0]]
  $region46: #{attack_predictor_forward.1} parent=0
    _
  %s11 = ssub.s32 1, %s9
  %s12 = scalar_select 0, %s11, %s9
  $region1: #{attack_predictor_forward.1} parent=0
    #allocation2 [shape = 'u8[8192]{0}', space=vmem, size = 0x2000, scoped, tag = 'input window, operand 1, single buffered']
    #allocation3 [shape = 's32[1]{0}', space=sflag, size = 0x4, scoped, tag = 'scoped memory for attack_predictor_forward.1']
    #allocation4 [shape = 's32[1]{0}', space=sflag, size = 0x4, scoped, tag = 'scoped memory for attack_predictor_forward.1']
    #allocation5 [shape = 'u8[2048]{0}', space=vmem, size = 0x800, scoped, tag = 'output window, operand 0, single buffered']
    %13 = vsyncpa [#allocation3], 0
    %14 = vsyncpa [#allocation4], 0
    // Predicated region
    $region2: #{attack_predictor_forward.1} parent=1 // pred_check
      _
    $region3: #{attack_predictor_forward.1} parent=1 // pred_check_branch
      %16 = sbr.rel (0) target = $region5
    $region4: #{attack_predictor_forward.1} parent=1 // pred_region
      _
    $region5: #{attack_predictor_forward.1} parent=1 // pred_fallthru
      _
    // Predicated region
    $region6: #{attack_predictor_forward.1} parent=1 // pred_check
      _
    $region7: #{attack_predictor_forward.1} parent=1 // pred_check_branch
      %18 = sbr.rel (0) target = $region9
    $region8: #{attack_predictor_forward.1} parent=1 // pred_region
      %20 = vsyncadd [#allocation3], 0
      %s21 = sshll.u32 %s1, 4
      %s22 = int_to_ptr.hbm [resolvable:$true] %s21
      %s23 = sshll.u32 [#allocation2], 4
      %s24 = int_to_ptr.vmem [resolvable:$true] %s23
      %29 = dma.hbm_to_vmem [thread:$0]  %s22, 256, %s24, [#allocation3], 128, 128, 8
    $region9: #{attack_predictor_forward.1} parent=1 // pred_fallthru
      _
    // Predicated region
    $region10: #{attack_predictor_forward.1} parent=1 // pred_check
      _
    $region11: #{attack_predictor_forward.1} parent=1 // pred_check_branch
      %31 = sbr.rel (0) target = $region13
    $region12: #{attack_predictor_forward.1} parent=1 // pred_region
      _
    $region13: #{attack_predictor_forward.1} parent=1 // pred_fallthru
      _
    // Predicated region
    $region14: #{attack_predictor_forward.1} parent=1 // pred_check
      _
    $region15: #{attack_predictor_forward.1} parent=1 // pred_check_branch
      %33 = sbr.rel (0) target = $region17
    $region16: #{attack_predictor_forward.1} parent=1 // pred_region
      _
    $region17: #{attack_predictor_forward.1} parent=1 // pred_fallthru
      _
    // Predicated region
    $region18: #{attack_predictor_forward.1} parent=1 // pred_check
      _
    $region19: #{attack_predictor_forward.1} parent=1 // pred_check_branch
      %35 = sbr.rel (0) target = $region21
    $region20: #{attack_predictor_forward.1} parent=1 // pred_region
      _
    $region21: #{attack_predictor_forward.1} parent=1 // pred_fallthru
      _
    // Predicated region
    $region22: #{attack_predictor_forward.1} parent=1 // pred_check
      _
    $region23: #{attack_predictor_forward.1} parent=1 // pred_check_branch
      %37 = sbr.rel (0) target = $region25
    $region24: #{attack_predictor_forward.1} parent=1 // pred_region
      _
    $region25: #{attack_predictor_forward.1} parent=1 // pred_fallthru
      _
    // Predicated region
    $region26: #{attack_predictor_forward.1} parent=1 // pred_check
      _
    $region27: #{attack_predictor_forward.1} parent=1 // pred_check_branch
      %39 = sbr.rel (0) target = $region29
    $region28: #{attack_predictor_forward.1} parent=1 // pred_region
      _
    $region29: #{attack_predictor_forward.1} parent=1 // pred_fallthru
      _
    // Predicated region
    $region30: #{attack_predictor_forward.1} parent=1 // pred_check
      _
    $region31: #{attack_predictor_forward.1} parent=1 // pred_check_branch
      %41 = sbr.rel (0) target = $region33
    $region32: #{attack_predictor_forward.1} parent=1 // pred_region
      _
    $region33: #{attack_predictor_forward.1} parent=1 // pred_fallthru
      _
    // Predicated region
    $region34: #{attack_predictor_forward.1} parent=1 // pred_check
      _
    $region35: #{attack_predictor_forward.1} parent=1 // pred_check_branch
      %43 = sbr.rel (0) target = $region37
    $region36: #{attack_predictor_forward.1} parent=1 // pred_region
      %45 = dma.done [#allocation3], 256
    $region37: #{attack_predictor_forward.1} parent=1 // pred_fallthru
      _
    %v46 = vld [vmem:[%s2] sm:$0xff]
    %v47 = vld [vmem:[%s2 + $0x8] sm:$0xff]
    %v48 = vld [vmem:[%s2 + $0x10] sm:$0xff]
    %v49 = vld [vmem:[%s2 + $0x18] sm:$0xff]
    %v50 = vld [vmem:[%s4] sm:$0xff]
    %v51 = vld [vmem:[%s4 + $0x8] sm:$0xff]
    %v52 = vld [vmem:[%s4 + $0x10] sm:$0xff]
    %v53 = vld [vmem:[%s4 + $0x18] sm:$0xff]
    %v54 = vld [vmem:[%s4 + $0x20] sm:$0xff]
    %v55 = vld [vmem:[%s4 + $0x28] sm:$0xff]
    %v56 = vld [vmem:[%s4 + $0x30] sm:$0xff]
    %v57 = vld [vmem:[%s4 + $0x38] sm:$0xff]
    %v58 = vld [vmem:[%s5] sm:$0x1]
    %v60 = vperm.slane %v58, 0
    %v62 = vld [vmem:[%s0] sm:$0xff]
    %v63 = vld [vmem:[%s0 + $0x8] sm:$0xff]
    %v64 = vld [vmem:[%s0 + $0x10] sm:$0xff]
    %v65 = vld [vmem:[%s0 + $0x18] sm:$0xff]
    %v66 = vld [vmem:[#allocation2] sm:$0xff]
    %v67 = vld [vmem:[#allocation2 + $0x8] sm:$0xff]
    %v68 = vld [vmem:[%s3] sm:$0x1]
    %v70 = vperm.slane %v68, 0
    %vm72 = vcmask 130048
    %v74 = vsel %vm72, %v62, 0
    %v77 = vsel %vm72, %v63, 0
    %v80 = vsel %vm72, %v64, 0
    %v83 = vsel %vm72, %v65, 0
    %85 = vmatpush.msra.mxu0 0.0
    %86 = vmatpush.msra.mxu0 0.0
    %87 = vmatpush.msra.mxu0 0.0
    %88 = vmatpush.msra.mxu0 0.0
    %89 = vmatpush.msra.mxu0 0.0
    %90 = vmatpush.msra.mxu0 0.0
    %91 = vmatpush.msra.mxu0 0.0
    %92 = vmatpush.msra.mxu0 0.0
    %93 = vmatpush.msra.mxu0 0.0
    %94 = vmatpush.msra.mxu0 0.0
    %95 = vmatpush.msra.mxu0 0.0
    %96 = vmatpush.msra.mxu0 0.0
    %97 = vmatpush.msra.mxu0 0.0
    %98 = vmatpush.msra.mxu0 0.0
    %99 = vmatpush.msra.mxu0 %v67
    %100 = vmatpush.msra.mxu0 %v66
    %101 = vmatmul.f32.gmra.mxu0 %v74
    %v102 = vpop.f32.mrf.mxu0
    %v103 = vadd.f32 %v70, %v102
    %104 = vmatmul.f32.gmra.mxu0 %v77
    %v105 = vpop.f32.mrf.mxu0
    %v106 = vadd.f32 %v70, %v105
    %107 = vmatmul.f32.gmra.mxu0 %v80
    %v108 = vpop.f32.mrf.mxu0
    %v109 = vadd.f32 %v70, %v108
    %110 = vmatmul.f32.gmra.mxu0 %v83
    %v111 = vpop.f32.mrf.mxu0
    %v112 = vadd.f32 %v70, %v111
    %113 = vdwg.mxu0
    %vm114 = vcmask 261120
    %v116 = vsel %vm114, 0.0, 0
    %118 = vmatpush.msra.mxu0 0.0
    %119 = vmatpush.msra.mxu0 0.0
    %120 = vmatpush.msra.mxu0 0.0
    %121 = vmatpush.msra.mxu0 0.0
    %122 = vmatpush.msra.mxu0 0.0
    %123 = vmatpush.msra.mxu0 0.0
    %124 = vmatpush.msra.mxu0 0.0
    %125 = vmatpush.msra.mxu0 0.0
    %126 = vmatpush.msra.mxu0 0.0
    %127 = vmatpush.msra.mxu0 0.0
    %128 = vmatpush.msra.mxu0 0.0
    %129 = vmatpush.msra.mxu0 0.0
    %130 = vmatpush.msra.mxu0 %v49
    %131 = vmatpush.msra.mxu0 %v48
    %132 = vmatpush.msra.mxu0 %v47
    %133 = vmatpush.msra.mxu0 %v46
    %134 = vmatmul.f32.gmra.mxu0 %v116
    %v135 = vpop.f32.mrf.mxu0
    %v136 = vadd.f32 0.0, %v135
    %137 = vdwg.mxu0
    %v138 = vadd.f32 %v103, %v136
    %v139 = vxor.u32 %v138, 2147483648
    %v140 = vmul.f32 %v139, 1.442695
    %v141 = vpow.pop %v140
    %v142 = vadd.f32 %v141, 1.0
    %v143 = vrcp.pop %v142
    %v144 = vmul.f32 %v142, %v143
    %v145 = vsub.f32 1.0, %v144
    %v146 = vmul.f32 %v143, %v145
    %v147 = vadd.f32 %v143, %v146
    %vm148 = vweird.f32 %v142
    %vm149 = vweird.f32 %v143
    %vm150 = vmor %vm148, %vm149
    %v151 = vsel %vm150, %v143, %v147
    %v152 = vand.u32 2147483647, %v142
    %vm153 = vcmp.eq.f32.partialorder %v152, 8.507059e+37
    %v154 = vand.u32 %v142, 2147483648
    %v155 = vor.u32 1.1754944e-38, %v154
    %v156 = vsel %vm153, %v155, %v151
    %v157 = vmul.f32 1.0, %v156
    %v158 = vtanh.pop %v138
    %v159 = vmul.f32 %v157, 0.0
    %161 = vrot.lane.b32.xlu0 %v158, 64
    %v162 = vpop.permute.xlu0 %161
    %v164 = vmul.f32 %v157, %v162
    %166 = vrot.lane.b32.xlu0 %v164, 32
    %v167 = vpop.permute.xlu0 %166
    %v169 = vadd.f32 %v159, %v167
    %v170 = vtanh.pop %v169
    %172 = vrot.lane.b32.xlu0 %v170, 64
    %v173 = vpop.permute.xlu0 %172
    %v175 = vmul.f32 %v157, %v173
    %177 = vrot.lane.b32.xlu0 %v175, 32
    %v178 = vpop.permute.xlu0 %177
    %v180 = vsel %vm114, %v178, 0.0
    %vm181 = vcmask 523264
    %v183 = vsel %vm181, %v180, 0
    %185 = vmatpush.msra.mxu0 0.0
    %186 = vmatpush.msra.mxu0 0.0
    %187 = vmatpush.msra.mxu0 0.0
    %188 = vmatpush.msra.mxu0 0.0
    %189 = vmatpush.msra.mxu0 0.0
    %190 = vmatpush.msra.mxu0 0.0
    %191 = vmatpush.msra.mxu0 0.0
    %192 = vmatpush.msra.mxu0 0.0
    %193 = vmatpush.msra.mxu0 %v57
    %194 = vmatpush.msra.mxu0 %v56
    %195 = vmatpush.msra.mxu0 %v55
    %196 = vmatpush.msra.mxu0 %v54
    %197 = vmatpush.msra.mxu0 %v53
    %198 = vmatpush.msra.mxu0 %v52
    %199 = vmatpush.msra.mxu0 %v51
    %200 = vmatpush.msra.mxu0 %v50
    %201 = vmatmul.f32.gmra.mxu0 %v183
    %v202 = vpop.f32.mrf.mxu0
    %v203 = vadd.f32 %v60, %v202
    %204 = vdwg.mxu0
    %v205 = vxor.u32 %v203, 2147483648
    %v206 = vmul.f32 %v205, 1.442695
    %v207 = vpow.pop %v206
    %v208 = vadd.f32 %v207, 1.0
    %v209 = vrcp.pop %v208
    %v210 = vmul.f32 %v208, %v209
    %v211 = vsub.f32 1.0, %v210
    %v212 = vmul.f32 %v209, %v211
    %v213 = vadd.f32 %v209, %v212
    %vm214 = vweird.f32 %v208
    %vm215 = vweird.f32 %v209
    %vm216 = vmor %vm214, %vm215
    %v217 = vsel %vm216, %v209, %v213
    %v218 = vand.u32 2147483647, %v208
    %vm219 = vcmp.eq.f32.partialorder %v218, 8.507059e+37
    %v220 = vand.u32 %v208, 2147483648
    %v221 = vor.u32 1.1754944e-38, %v220
    %v222 = vsel %vm219, %v221, %v217
    %v223 = vmul.f32 1.0, %v222
    %v224 = vtanh.pop %v203
    %v225 = vmul.f32 %v223, 0.0
    %227 = vrot.lane.b32.xlu0 %v224, 64
    %v228 = vpop.permute.xlu0 %227
    %v230 = vmul.f32 %v223, %v228
    %232 = vrot.lane.b32.xlu0 %v230, 32
    %v233 = vpop.permute.xlu0 %232
    %v235 = vadd.f32 %v225, %v233
    %v236 = vtanh.pop %v235
    %238 = vrot.lane.b32.xlu0 %v236, 64
    %v239 = vpop.permute.xlu0 %238
    %v241 = vmul.f32 %v223, %v239
    %v242 = vsel %vm114, %v178, 0
    %244 = vmatpush.msra.mxu0 0.0
    %245 = vmatpush.msra.mxu0 0.0
    %246 = vmatpush.msra.mxu0 0.0
    %247 = vmatpush.msra.mxu0 0.0
    %248 = vmatpush.msra.mxu0 0.0
    %249 = vmatpush.msra.mxu0 0.0
    %250 = vmatpush.msra.mxu0 0.0
    %251 = vmatpush.msra.mxu0 0.0
    %252 = vmatpush.msra.mxu0 0.0
    %253 = vmatpush.msra.mxu0 0.0
    %254 = vmatpush.msra.mxu0 0.0
    %255 = vmatpush.msra.mxu0 0.0
    %256 = vmatpush.msra.mxu0 %v49
    %257 = vmatpush.msra.mxu0 %v48
    %258 = vmatpush.msra.mxu0 %v47
    %259 = vmatpush.msra.mxu0 %v46
    %260 = vmatmul.f32.gmra.mxu0 %v242
    %v261 = vpop.f32.mrf.mxu0
    %v262 = vadd.f32 0.0, %v261
    %263 = vdwg.mxu0
    %v265 = vrot.slane %v262, 4
    %v267 = vadd.f32 %v103, %v265
    %v268 = vxor.u32 %v267, 2147483648
    %v269 = vmul.f32 %v268, 1.442695
    %v270 = vpow.pop %v269
    %v271 = vadd.f32 %v270, 1.0
    %v272 = vrcp.pop %v271
    %v273 = vmul.f32 %v271, %v272
    %v274 = vsub.f32 1.0, %v273
    %v275 = vmul.f32 %v272, %v274
    %v276 = vadd.f32 %v272, %v275
    %vm277 = vweird.f32 %v271
    %vm278 = vweird.f32 %v272
    %vm279 = vmor %vm277, %vm278
    %v280 = vsel %vm279, %v272, %v276
    %v281 = vand.u32 2147483647, %v271
    %vm282 = vcmp.eq.f32.partialorder %v281, 8.507059e+37
    %v283 = vand.u32 %v271, 2147483648
    %v284 = vor.u32 1.1754944e-38, %v283
    %v285 = vsel %vm282, %v284, %v280
    %v286 = vmul.f32 1.0, %v285
    %v287 = vtanh.pop %v267
    %v289 = vrot.slane %v169, 4
    %v291 = vmul.f32 %v286, %v289
    %293 = vrot.lane.b32.xlu0 %v287, 64
    %v294 = vpop.permute.xlu0 %293
    %v296 = vmul.f32 %v286, %v294
    %298 = vrot.lane.b32.xlu0 %v296, 32
    %v299 = vpop.permute.xlu0 %298
    %v301 = vadd.f32 %v291, %v299
    %v302 = vtanh.pop %v301
    %304 = vrot.lane.b32.xlu0 %v302, 64
    %v305 = vpop.permute.xlu0 %304
    %v307 = vmul.f32 %v286, %v305
    %309 = vrot.lane.b32.xlu0 %v307, 32
    %v310 = vpop.permute.xlu0 %309
    %v313 = vrot.slane %v241, 4
    %314 = vrot.lane.b32.xlu0 %v313, 64
    %v315 = vpop.permute.xlu0 %314
    %v317 = vsel %vm114, %v310, %v315
    %v319 = vrot.slane %v317, 4
    %v320 = vsel %vm181, %v319, 0
    %322 = vmatpush.msra.mxu0 0.0
    %323 = vmatpush.msra.mxu0 0.0
    %324 = vmatpush.msra.mxu0 0.0
    %325 = vmatpush.msra.mxu0 0.0
    %326 = vmatpush.msra.mxu0 0.0
    %327 = vmatpush.msra.mxu0 0.0
    %328 = vmatpush.msra.mxu0 0.0
    %329 = vmatpush.msra.mxu0 0.0
    %330 = vmatpush.msra.mxu0 %v57
    %331 = vmatpush.msra.mxu0 %v56
    %332 = vmatpush.msra.mxu0 %v55
    %333 = vmatpush.msra.mxu0 %v54
    %334 = vmatpush.msra.mxu0 %v53
    %335 = vmatpush.msra.mxu0 %v52
    %336 = vmatpush.msra.mxu0 %v51
    %337 = vmatpush.msra.mxu0 %v50
    %338 = vmatmul.f32.gmra.mxu0 %v320
    %v339 = vpop.f32.mrf.mxu0
    %v340 = vadd.f32 %v60, %v339
    %341 = vdwg.mxu0
    %v342 = vxor.u32 %v340, 2147483648
    %v343 = vmul.f32 %v342, 1.442695
    %v344 = vpow.pop %v343
    %v345 = vadd.f32 %v344, 1.0
    %v346 = vrcp.pop %v345
    %v347 = vmul.f32 %v345, %v346
    %v348 = vsub.f32 1.0, %v347
    %v349 = vmul.f32 %v346, %v348
    %v350 = vadd.f32 %v346, %v349
    %vm351 = vweird.f32 %v345
    %vm352 = vweird.f32 %v346
    %vm353 = vmor %vm351, %vm352
    %v354 = vsel %vm353, %v346, %v350
    %v355 = vand.u32 2147483647, %v345
    %vm356 = vcmp.eq.f32.partialorder %v355, 8.507059e+37
    %v357 = vand.u32 %v345, 2147483648
    %v358 = vor.u32 1.1754944e-38, %v357
    %v359 = vsel %vm356, %v358, %v354
    %v360 = vmul.f32 1.0, %v359
    %v361 = vtanh.pop %v340
    %v362 = vmul.f32 %v360, %v235
    %364 = vrot.lane.b32.xlu0 %v361, 64
    %v365 = vpop.permute.xlu0 %364
    %v367 = vmul.f32 %v360, %v365
    %369 = vrot.lane.b32.xlu0 %v367, 32
    %v370 = vpop.permute.xlu0 %369
    %v372 = vadd.f32 %v362, %v370
    %v373 = vtanh.pop %v372
    %375 = vrot.lane.b32.xlu0 %v373, 64
    %v376 = vpop.permute.xlu0 %375
    %v378 = vmul.f32 %v360, %v376
    %v379 = vrot.slane %v307, 4
    %380 = vrot.lane.b32.xlu0 %v379, 32
    %v381 = vpop.permute.xlu0 %380
    %v382 = vsel %vm114, %v381, 0
    %384 = vmatpush.msra.mxu0 0.0
    %385 = vmatpush.msra.mxu0 0.0
    %386 = vmatpush.msra.mxu0 0.0
    %387 = vmatpush.msra.mxu0 0.0
    %388 = vmatpush.msra.mxu0 0.0
    %389 = vmatpush.msra.mxu0 0.0
    %390 = vmatpush.msra.mxu0 0.0
    %391 = vmatpush.msra.mxu0 0.0
    %392 = vmatpush.msra.mxu0 0.0
    %393 = vmatpush.msra.mxu0 0.0
    %394 = vmatpush.msra.mxu0 0.0
    %395 = vmatpush.msra.mxu0 0.0
    %396 = vmatpush.msra.mxu0 %v49
    %397 = vmatpush.msra.mxu0 %v48
    %398 = vmatpush.msra.mxu0 %v47
    %399 = vmatpush.msra.mxu0 %v46
    %400 = vmatmul.f32.gmra.mxu0 %v382
    %v401 = vpop.f32.mrf.mxu0
    %v402 = vadd.f32 0.0, %v401
    %403 = vdwg.mxu0
    %v404 = vadd.f32 %v106, %v402
    %v405 = vxor.u32 %v404, 2147483648
    %v406 = vmul.f32 %v405, 1.442695
    %v407 = vpow.pop %v406
    %v408 = vadd.f32 %v407, 1.0
    %v409 = vrcp.pop %v408
    %v410 = vmul.f32 %v408, %v409
    %v411 = vsub.f32 1.0, %v410
    %v412 = vmul.f32 %v409, %v411
    %v413 = vadd.f32 %v409, %v412
    %vm414 = vweird.f32 %v408
    %vm415 = vweird.f32 %v409
    %vm416 = vmor %vm414, %vm415
    %v417 = vsel %vm416, %v409, %v413
    %v418 = vand.u32 2147483647, %v408
    %vm419 = vcmp.eq.f32.partialorder %v418, 8.507059e+37
    %v420 = vand.u32 %v408, 2147483648
    %v421 = vor.u32 1.1754944e-38, %v420
    %v422 = vsel %vm419, %v421, %v417
    %v423 = vmul.f32 1.0, %v422
    %v424 = vtanh.pop %v404
    %v426 = vrot.slane %v301, 4
    %v428 = vmul.f32 %v423, %v426
    %430 = vrot.lane.b32.xlu0 %v424, 64
    %v431 = vpop.permute.xlu0 %430
    %v433 = vmul.f32 %v423, %v431
    %435 = vrot.lane.b32.xlu0 %v433, 32
    %v436 = vpop.permute.xlu0 %435
    %v438 = vadd.f32 %v428, %v436
    %v439 = vtanh.pop %v438
    %441 = vrot.lane.b32.xlu0 %v439, 64
    %v442 = vpop.permute.xlu0 %441
    %v444 = vmul.f32 %v423, %v442
    %446 = vrot.lane.b32.xlu0 %v444, 32
    %v447 = vpop.permute.xlu0 %446
    %450 = vrot.lane.b32.xlu0 %v378, 64
    %v451 = vpop.permute.xlu0 %450
    %v453 = vsel %vm114, %v447, %v451
    %v455 = vsel %vm181, %v453, 0
    %457 = vmatpush.msra.mxu0 0.0
    %458 = vmatpush.msra.mxu0 0.0
    %459 = vmatpush.msra.mxu0 0.0
    %460 = vmatpush.msra.mxu0 0.0
    %461 = vmatpush.msra.mxu0 0.0
    %462 = vmatpush.msra.mxu0 0.0
    %463 = vmatpush.msra.mxu0 0.0
    %464 = vmatpush.msra.mxu0 0.0
    %465 = vmatpush.msra.mxu0 %v57
    %466 = vmatpush.msra.mxu0 %v56
    %467 = vmatpush.msra.mxu0 %v55
    %468 = vmatpush.msra.mxu0 %v54
    %469 = vmatpush.msra.mxu0 %v53
    %470 = vmatpush.msra.mxu0 %v52
    %471 = vmatpush.msra.mxu0 %v51
    %472 = vmatpush.msra.mxu0 %v50
    %473 = vmatmul.f32.gmra.mxu0 %v455
    %v474 = vpop.f32.mrf.mxu0
    %v475 = vadd.f32 %v60, %v474
    %476 = vdwg.mxu0
    %v477 = vxor.u32 %v475, 2147483648
    %v478 = vmul.f32 %v477, 1.442695
    %v479 = vpow.pop %v478
    %v480 = vadd.f32 %v479, 1.0
    %v481 = vrcp.pop %v480
    %v482 = vmul.f32 %v480, %v481
    %v483 = vsub.f32 1.0, %v482
    %v484 = vmul.f32 %v481, %v483
    %v485 = vadd.f32 %v481, %v484
    %vm486 = vweird.f32 %v480
    %vm487 = vweird.f32 %v481
    %vm488 = vmor %vm486, %vm487
    %v489 = vsel %vm488, %v481, %v485
    %v490 = vand.u32 2147483647, %v480
    %vm491 = vcmp.eq.f32.partialorder %v490, 8.507059e+37
    %v492 = vand.u32 %v480, 2147483648
    %v493 = vor.u32 1.1754944e-38, %v492
    %v494 = vsel %vm491, %v493, %v489
    %v495 = vmul.f32 1.0, %v494
    %v496 = vtanh.pop %v475
    %v497 = vmul.f32 %v495, %v372
    %499 = vrot.lane.b32.xlu0 %v496, 64
    %v500 = vpop.permute.xlu0 %499
    %v502 = vmul.f32 %v495, %v500
    %504 = vrot.lane.b32.xlu0 %v502, 32
    %v505 = vpop.permute.xlu0 %504
    %v507 = vadd.f32 %v497, %v505
    %v508 = vtanh.pop %v507
    %510 = vrot.lane.b32.xlu0 %v508, 64
    %v511 = vpop.permute.xlu0 %510
    %v513 = vmul.f32 %v495, %v511
    %v514 = vsel %vm114, %v447, 0
    %516 = vmatpush.msra.mxu0 0.0
    %517 = vmatpush.msra.mxu0 0.0
    %518 = vmatpush.msra.mxu0 0.0
    %519 = vmatpush.msra.mxu0 0.0
    %520 = vmatpush.msra.mxu0 0.0
    %521 = vmatpush.msra.mxu0 0.0
    %522 = vmatpush.msra.mxu0 0.0
    %523 = vmatpush.msra.mxu0 0.0
    %524 = vmatpush.msra.mxu0 0.0
    %525 = vmatpush.msra.mxu0 0.0
    %526 = vmatpush.msra.mxu0 0.0
    %527 = vmatpush.msra.mxu0 0.0
    %528 = vmatpush.msra.mxu0 %v49
    %529 = vmatpush.msra.mxu0 %v48
    %530 = vmatpush.msra.mxu0 %v47
    %531 = vmatpush.msra.mxu0 %v46
    %532 = vmatmul.f32.gmra.mxu0 %v514
    %v533 = vpop.f32.mrf.mxu0
    %v534 = vadd.f32 0.0, %v533
    %535 = vdwg.mxu0
    %v537 = vrot.slane %v534, 4
    %v539 = vadd.f32 %v106, %v537
    %v540 = vxor.u32 %v539, 2147483648
    %v541 = vmul.f32 %v540, 1.442695
    %v542 = vpow.pop %v541
    %v543 = vadd.f32 %v542, 1.0
    %v544 = vrcp.pop %v543
    %v545 = vmul.f32 %v543, %v544
    %v546 = vsub.f32 1.0, %v545
    %v547 = vmul.f32 %v544, %v546
    %v548 = vadd.f32 %v544, %v547
    %vm549 = vweird.f32 %v543
    %vm550 = vweird.f32 %v544
    %vm551 = vmor %vm549, %vm550
    %v552 = vsel %vm551, %v544, %v548
    %v553 = vand.u32 2147483647, %v543
    %vm554 = vcmp.eq.f32.partialorder %v553, 8.507059e+37
    %v555 = vand.u32 %v543, 2147483648
    %v556 = vor.u32 1.1754944e-38, %v555
    %v557 = vsel %vm554, %v556, %v552
    %v558 = vmul.f32 1.0, %v557
    %v559 = vtanh.pop %v539
    %v561 = vrot.slane %v438, 4
    %v563 = vmul.f32 %v558, %v561
    %565 = vrot.lane.b32.xlu0 %v559, 64
    %v566 = vpop.permute.xlu0 %565
    %v568 = vmul.f32 %v558, %v566
    %570 = vrot.lane.b32.xlu0 %v568, 32
    %v571 = vpop.permute.xlu0 %570
    %v573 = vadd.f32 %v563, %v571
    %v574 = vtanh.pop %v573
    %576 = vrot.lane.b32.xlu0 %v574, 64
    %v577 = vpop.permute.xlu0 %576
    %v579 = vmul.f32 %v558, %v577
    %581 = vrot.lane.b32.xlu0 %v579, 32
    %v582 = vpop.permute.xlu0 %581
    %v585 = vrot.slane %v513, 4
    %586 = vrot.lane.b32.xlu0 %v585, 64
    %v587 = vpop.permute.xlu0 %586
    %v589 = vsel %vm114, %v582, %v587
    %v591 = vrot.slane %v589, 4
    %v592 = vsel %vm181, %v591, 0
    %594 = vmatpush.msra.mxu0 0.0
    %595 = vmatpush.msra.mxu0 0.0
    %596 = vmatpush.msra.mxu0 0.0
    %597 = vmatpush.msra.mxu0 0.0
    %598 = vmatpush.msra.mxu0 0.0
    %599 = vmatpush.msra.mxu0 0.0
    %600 = vmatpush.msra.mxu0 0.0
    %601 = vmatpush.msra.mxu0 0.0
    %602 = vmatpush.msra.mxu0 %v57
    %603 = vmatpush.msra.mxu0 %v56
    %604 = vmatpush.msra.mxu0 %v55
    %605 = vmatpush.msra.mxu0 %v54
    %606 = vmatpush.msra.mxu0 %v53
    %607 = vmatpush.msra.mxu0 %v52
    %608 = vmatpush.msra.mxu0 %v51
    %609 = vmatpush.msra.mxu0 %v50
    %610 = vmatmul.f32.gmra.mxu0 %v592
    %v611 = vpop.f32.mrf.mxu0
    %v612 = vadd.f32 %v60, %v611
    %613 = vdwg.mxu0
    %v614 = vxor.u32 %v612, 2147483648
    %v615 = vmul.f32 %v614, 1.442695
    %v616 = vpow.pop %v615
    %v617 = vadd.f32 %v616, 1.0
    %v618 = vrcp.pop %v617
    %v619 = vmul.f32 %v617, %v618
    %v620 = vsub.f32 1.0, %v619
    %v621 = vmul.f32 %v618, %v620
    %v622 = vadd.f32 %v618, %v621
    %vm623 = vweird.f32 %v617
    %vm624 = vweird.f32 %v618
    %vm625 = vmor %vm623, %vm624
    %v626 = vsel %vm625, %v618, %v622
    %v627 = vand.u32 2147483647, %v617
    %vm628 = vcmp.eq.f32.partialorder %v627, 8.507059e+37
    %v629 = vand.u32 %v617, 2147483648
    %v630 = vor.u32 1.1754944e-38, %v629
    %v631 = vsel %vm628, %v630, %v626
    %v632 = vmul.f32 1.0, %v631
    %v633 = vtanh.pop %v612
    %v634 = vmul.f32 %v632, %v507
    %636 = vrot.lane.b32.xlu0 %v633, 64
    %v637 = vpop.permute.xlu0 %636
    %v639 = vmul.f32 %v632, %v637
    %641 = vrot.lane.b32.xlu0 %v639, 32
    %v642 = vpop.permute.xlu0 %641
    %v644 = vadd.f32 %v634, %v642
    %v645 = vtanh.pop %v644
    %647 = vrot.lane.b32.xlu0 %v645, 64
    %v648 = vpop.permute.xlu0 %647
    %v650 = vmul.f32 %v632, %v648
    %v651 = vrot.slane %v579, 4
    %652 = vrot.lane.b32.xlu0 %v651, 32
    %v653 = vpop.permute.xlu0 %652
    %v654 = vsel %vm114, %v653, 0
    %656 = vmatpush.msra.mxu0 0.0
    %657 = vmatpush.msra.mxu0 0.0
    %658 = vmatpush.msra.mxu0 0.0
    %659 = vmatpush.msra.mxu0 0.0
    %660 = vmatpush.msra.mxu0 0.0
    %661 = vmatpush.msra.mxu0 0.0
    %662 = vmatpush.msra.mxu0 0.0
    %663 = vmatpush.msra.mxu0 0.0
    %664 = vmatpush.msra.mxu0 0.0
    %665 = vmatpush.msra.mxu0 0.0
    %666 = vmatpush.msra.mxu0 0.0
    %667 = vmatpush.msra.mxu0 0.0
    %668 = vmatpush.msra.mxu0 %v49
    %669 = vmatpush.msra.mxu0 %v48
    %670 = vmatpush.msra.mxu0 %v47
    %671 = vmatpush.msra.mxu0 %v46
    %672 = vmatmul.f32.gmra.mxu0 %v654
    %v673 = vpop.f32.mrf.mxu0
    %v674 = vadd.f32 0.0, %v673
    %675 = vdwg.mxu0
    %v676 = vadd.f32 %v109, %v674
    %v677 = vxor.u32 %v676, 2147483648
    %v678 = vmul.f32 %v677, 1.442695
    %v679 = vpow.pop %v678
    %v680 = vadd.f32 %v679, 1.0
    %v681 = vrcp.pop %v680
    %v682 = vmul.f32 %v680, %v681
    %v683 = vsub.f32 1.0, %v682
    %v684 = vmul.f32 %v681, %v683
    %v685 = vadd.f32 %v681, %v684
    %vm686 = vweird.f32 %v680
    %vm687 = vweird.f32 %v681
    %vm688 = vmor %vm686, %vm687
    %v689 = vsel %vm688, %v681, %v685
    %v690 = vand.u32 2147483647, %v680
    %vm691 = vcmp.eq.f32.partialorder %v690, 8.507059e+37
    %v692 = vand.u32 %v680, 2147483648
    %v693 = vor.u32 1.1754944e-38, %v692
    %v694 = vsel %vm691, %v693, %v689
    %v695 = vmul.f32 1.0, %v694
    %v696 = vtanh.pop %v676
    %v698 = vrot.slane %v573, 4
    %v700 = vmul.f32 %v695, %v698
    %702 = vrot.lane.b32.xlu0 %v696, 64
    %v703 = vpop.permute.xlu0 %702
    %v705 = vmul.f32 %v695, %v703
    %707 = vrot.lane.b32.xlu0 %v705, 32
    %v708 = vpop.permute.xlu0 %707
    %v710 = vadd.f32 %v700, %v708
    %v711 = vtanh.pop %v710
    %713 = vrot.lane.b32.xlu0 %v711, 64
    %v714 = vpop.permute.xlu0 %713
    %v716 = vmul.f32 %v695, %v714
    %718 = vrot.lane.b32.xlu0 %v716, 32
    %v719 = vpop.permute.xlu0 %718
    %722 = vrot.lane.b32.xlu0 %v650, 64
    %v723 = vpop.permute.xlu0 %722
    %v725 = vsel %vm114, %v719, %v723
    %v727 = vsel %vm181, %v725, 0
    %729 = vmatpush.msra.mxu0 0.0
    %730 = vmatpush.msra.mxu0 0.0
    %731 = vmatpush.msra.mxu0 0.0
    %732 = vmatpush.msra.mxu0 0.0
    %733 = vmatpush.msra.mxu0 0.0
    %734 = vmatpush.msra.mxu0 0.0
    %735 = vmatpush.msra.mxu0 0.0
    %736 = vmatpush.msra.mxu0 0.0
    %737 = vmatpush.msra.mxu0 %v57
    %738 = vmatpush.msra.mxu0 %v56
    %739 = vmatpush.msra.mxu0 %v55
    %740 = vmatpush.msra.mxu0 %v54
    %741 = vmatpush.msra.mxu0 %v53
    %742 = vmatpush.msra.mxu0 %v52
    %743 = vmatpush.msra.mxu0 %v51
    %744 = vmatpush.msra.mxu0 %v50
    %745 = vmatmul.f32.gmra.mxu0 %v727
    %v746 = vpop.f32.mrf.mxu0
    %v747 = vadd.f32 %v60, %v746
    %748 = vdwg.mxu0
    %v749 = vxor.u32 %v747, 2147483648
    %v750 = vmul.f32 %v749, 1.442695
    %v751 = vpow.pop %v750
    %v752 = vadd.f32 %v751, 1.0
    %v753 = vrcp.pop %v752
    %v754 = vmul.f32 %v752, %v753
    %v755 = vsub.f32 1.0, %v754
    %v756 = vmul.f32 %v753, %v755
    %v757 = vadd.f32 %v753, %v756
    %vm758 = vweird.f32 %v752
    %vm759 = vweird.f32 %v753
    %vm760 = vmor %vm758, %vm759
    %v761 = vsel %vm760, %v753, %v757
    %v762 = vand.u32 2147483647, %v752
    %vm763 = vcmp.eq.f32.partialorder %v762, 8.507059e+37
    %v764 = vand.u32 %v752, 2147483648
    %v765 = vor.u32 1.1754944e-38, %v764
    %v766 = vsel %vm763, %v765, %v761
    %v767 = vmul.f32 1.0, %v766
    %v768 = vtanh.pop %v747
    %v769 = vmul.f32 %v767, %v644
    %771 = vrot.lane.b32.xlu0 %v768, 64
    %v772 = vpop.permute.xlu0 %771
    %v774 = vmul.f32 %v767, %v772
    %776 = vrot.lane.b32.xlu0 %v774, 32
    %v777 = vpop.permute.xlu0 %776
    %v779 = vadd.f32 %v769, %v777
    %v780 = vtanh.pop %v779
    %782 = vrot.lane.b32.xlu0 %v780, 64
    %v783 = vpop.permute.xlu0 %782
    %v785 = vmul.f32 %v767, %v783
    %v786 = vsel %vm114, %v719, 0
    %788 = vmatpush.msra.mxu0 0.0
    %789 = vmatpush.msra.mxu0 0.0
    %790 = vmatpush.msra.mxu0 0.0
    %791 = vmatpush.msra.mxu0 0.0
    %792 = vmatpush.msra.mxu0 0.0
    %793 = vmatpush.msra.mxu0 0.0
    %794 = vmatpush.msra.mxu0 0.0
    %795 = vmatpush.msra.mxu0 0.0
    %796 = vmatpush.msra.mxu0 0.0
    %797 = vmatpush.msra.mxu0 0.0
    %798 = vmatpush.msra.mxu0 0.0
    %799 = vmatpush.msra.mxu0 0.0
    %800 = vmatpush.msra.mxu0 %v49
    %801 = vmatpush.msra.mxu0 %v48
    %802 = vmatpush.msra.mxu0 %v47
    %803 = vmatpush.msra.mxu0 %v46
    %804 = vmatmul.f32.gmra.mxu0 %v786
    %v805 = vpop.f32.mrf.mxu0
    %v806 = vadd.f32 0.0, %v805
    %807 = vdwg.mxu0
    %v809 = vrot.slane %v806, 4
    %v811 = vadd.f32 %v109, %v809
    %v812 = vxor.u32 %v811, 2147483648
    %v813 = vmul.f32 %v812, 1.442695
    %v814 = vpow.pop %v813
    %v815 = vadd.f32 %v814, 1.0
    %v816 = vrcp.pop %v815
    %v817 = vmul.f32 %v815, %v816
    %v818 = vsub.f32 1.0, %v817
    %v819 = vmul.f32 %v816, %v818
    %v820 = vadd.f32 %v816, %v819
    %vm821 = vweird.f32 %v815
    %vm822 = vweird.f32 %v816
    %vm823 = vmor %vm821, %vm822
    %v824 = vsel %vm823, %v816, %v820
    %v825 = vand.u32 2147483647, %v815
    %vm826 = vcmp.eq.f32.partialorder %v825, 8.507059e+37
    %v827 = vand.u32 %v815, 2147483648
    %v828 = vor.u32 1.1754944e-38, %v827
    %v829 = vsel %vm826, %v828, %v824
    %v830 = vmul.f32 1.0, %v829
    %v831 = vtanh.pop %v811
    %v833 = vrot.slane %v710, 4
    %v835 = vmul.f32 %v830, %v833
    %837 = vrot.lane.b32.xlu0 %v831, 64
    %v838 = vpop.permute.xlu0 %837
    %v840 = vmul.f32 %v830, %v838
    %842 = vrot.lane.b32.xlu0 %v840, 32
    %v843 = vpop.permute.xlu0 %842
    %v845 = vadd.f32 %v835, %v843
    %v846 = vtanh.pop %v845
    %848 = vrot.lane.b32.xlu0 %v846, 64
    %v849 = vpop.permute.xlu0 %848
    %v851 = vmul.f32 %v830, %v849
    %853 = vrot.lane.b32.xlu0 %v851, 32
    %v854 = vpop.permute.xlu0 %853
    %v857 = vrot.slane %v785, 4
    %858 = vrot.lane.b32.xlu0 %v857, 64
    %v859 = vpop.permute.xlu0 %858
    %v861 = vsel %vm114, %v854, %v859
    %v863 = vrot.slane %v861, 4
    %v864 = vsel %vm181, %v863, 0
    %866 = vmatpush.msra.mxu0 0.0
    %867 = vmatpush.msra.mxu0 0.0
    %868 = vmatpush.msra.mxu0 0.0
    %869 = vmatpush.msra.mxu0 0.0
    %870 = vmatpush.msra.mxu0 0.0
    %871 = vmatpush.msra.mxu0 0.0
    %872 = vmatpush.msra.mxu0 0.0
    %873 = vmatpush.msra.mxu0 0.0
    %874 = vmatpush.msra.mxu0 %v57
    %875 = vmatpush.msra.mxu0 %v56
    %876 = vmatpush.msra.mxu0 %v55
    %877 = vmatpush.msra.mxu0 %v54
    %878 = vmatpush.msra.mxu0 %v53
    %879 = vmatpush.msra.mxu0 %v52
    %880 = vmatpush.msra.mxu0 %v51
    %881 = vmatpush.msra.mxu0 %v50
    %882 = vmatmul.f32.gmra.mxu0 %v864
    %v883 = vpop.f32.mrf.mxu0
    %v884 = vadd.f32 %v60, %v883
    %885 = vdwg.mxu0
    %v886 = vxor.u32 %v884, 2147483648
    %v887 = vmul.f32 %v886, 1.442695
    %v888 = vpow.pop %v887
    %v889 = vadd.f32 %v888, 1.0
    %v890 = vrcp.pop %v889
    %v891 = vmul.f32 %v889, %v890
    %v892 = vsub.f32 1.0, %v891
    %v893 = vmul.f32 %v890, %v892
    %v894 = vadd.f32 %v890, %v893
    %vm895 = vweird.f32 %v889
    %vm896 = vweird.f32 %v890
    %vm897 = vmor %vm895, %vm896
    %v898 = vsel %vm897, %v890, %v894
    %v899 = vand.u32 2147483647, %v889
    %vm900 = vcmp.eq.f32.partialorder %v899, 8.507059e+37
    %v901 = vand.u32 %v889, 2147483648
    %v902 = vor.u32 1.1754944e-38, %v901
    %v903 = vsel %vm900, %v902, %v898
    %v904 = vmul.f32 1.0, %v903
    %v905 = vtanh.pop %v884
    %v906 = vmul.f32 %v904, %v779
    %908 = vrot.lane.b32.xlu0 %v905, 64
    %v909 = vpop.permute.xlu0 %908
    %v911 = vmul.f32 %v904, %v909
    %913 = vrot.lane.b32.xlu0 %v911, 32
    %v914 = vpop.permute.xlu0 %913
    %v916 = vadd.f32 %v906, %v914
    %v917 = vtanh.pop %v916
    %919 = vrot.lane.b32.xlu0 %v917, 64
    %v920 = vpop.permute.xlu0 %919
    %v922 = vmul.f32 %v904, %v920
    %v923 = vrot.slane %v851, 4
    %924 = vrot.lane.b32.xlu0 %v923, 32
    %v925 = vpop.permute.xlu0 %924
    %v926 = vsel %vm114, %v925, 0
    %928 = vmatpush.msra.mxu0 0.0
    %929 = vmatpush.msra.mxu0 0.0
    %930 = vmatpush.msra.mxu0 0.0
    %931 = vmatpush.msra.mxu0 0.0
    %932 = vmatpush.msra.mxu0 0.0
    %933 = vmatpush.msra.mxu0 0.0
    %934 = vmatpush.msra.mxu0 0.0
    %935 = vmatpush.msra.mxu0 0.0
    %936 = vmatpush.msra.mxu0 0.0
    %937 = vmatpush.msra.mxu0 0.0
    %938 = vmatpush.msra.mxu0 0.0
    %939 = vmatpush.msra.mxu0 0.0
    %940 = vmatpush.msra.mxu0 %v49
    %941 = vmatpush.msra.mxu0 %v48
    %942 = vmatpush.msra.mxu0 %v47
    %943 = vmatpush.msra.mxu0 %v46
    %944 = vmatmul.f32.gmra.mxu0 %v926
    %v945 = vpop.f32.mrf.mxu0
    %v946 = vadd.f32 0.0, %v945
    %947 = vdwg.mxu0
    %v948 = vadd.f32 %v112, %v946
    %v949 = vxor.u32 %v948, 2147483648
    %v950 = vmul.f32 %v949, 1.442695
    %v951 = vpow.pop %v950
    %v952 = vadd.f32 %v951, 1.0
    %v953 = vrcp.pop %v952
    %v954 = vmul.f32 %v952, %v953
    %v955 = vsub.f32 1.0, %v954
    %v956 = vmul.f32 %v953, %v955
    %v957 = vadd.f32 %v953, %v956
    %vm958 = vweird.f32 %v952
    %vm959 = vweird.f32 %v953
    %vm960 = vmor %vm958, %vm959
    %v961 = vsel %vm960, %v953, %v957
    %v962 = vand.u32 2147483647, %v952
    %vm963 = vcmp.eq.f32.partialorder %v962, 8.507059e+37
    %v964 = vand.u32 %v952, 2147483648
    %v965 = vor.u32 1.1754944e-38, %v964
    %v966 = vsel %vm963, %v965, %v961
    %v967 = vmul.f32 1.0, %v966
    %v968 = vtanh.pop %v948
    %v970 = vrot.slane %v845, 4
    %v972 = vmul.f32 %v967, %v970
    %974 = vrot.lane.b32.xlu0 %v968, 64
    %v975 = vpop.permute.xlu0 %974
    %v977 = vmul.f32 %v967, %v975
    %979 = vrot.lane.b32.xlu0 %v977, 32
    %v980 = vpop.permute.xlu0 %979
    %v982 = vadd.f32 %v972, %v980
    %v983 = vtanh.pop %v982
    %985 = vrot.lane.b32.xlu0 %v983, 64
    %v986 = vpop.permute.xlu0 %985
    %v988 = vmul.f32 %v967, %v986
    %990 = vrot.lane.b32.xlu0 %v988, 32
    %v991 = vpop.permute.xlu0 %990
    %994 = vrot.lane.b32.xlu0 %v922, 64
    %v995 = vpop.permute.xlu0 %994
    %v997 = vsel %vm114, %v991, %v995
    %v999 = vsel %vm181, %v997, 0
    %1001 = vmatpush.msra.mxu0 0.0
    %1002 = vmatpush.msra.mxu0 0.0
    %1003 = vmatpush.msra.mxu0 0.0
    %1004 = vmatpush.msra.mxu0 0.0
    %1005 = vmatpush.msra.mxu0 0.0
    %1006 = vmatpush.msra.mxu0 0.0
    %1007 = vmatpush.msra.mxu0 0.0
    %1008 = vmatpush.msra.mxu0 0.0
    %1009 = vmatpush.msra.mxu0 %v57
    %1010 = vmatpush.msra.mxu0 %v56
    %1011 = vmatpush.msra.mxu0 %v55
    %1012 = vmatpush.msra.mxu0 %v54
    %1013 = vmatpush.msra.mxu0 %v53
    %1014 = vmatpush.msra.mxu0 %v52
    %1015 = vmatpush.msra.mxu0 %v51
    %1016 = vmatpush.msra.mxu0 %v50
    %1017 = vmatmul.f32.gmra.mxu0 %v999
    %v1018 = vpop.f32.mrf.mxu0
    %v1019 = vadd.f32 %v60, %v1018
    %1020 = vdwg.mxu0
    %v1021 = vxor.u32 %v1019, 2147483648
    %v1022 = vmul.f32 %v1021, 1.442695
    %v1023 = vpow.pop %v1022
    %v1024 = vadd.f32 %v1023, 1.0
    %v1025 = vrcp.pop %v1024
    %v1026 = vmul.f32 %v1024, %v1025
    %v1027 = vsub.f32 1.0, %v1026
    %v1028 = vmul.f32 %v1025, %v1027
    %v1029 = vadd.f32 %v1025, %v1028
    %vm1030 = vweird.f32 %v1024
    %vm1031 = vweird.f32 %v1025
    %vm1032 = vmor %vm1030, %vm1031
    %v1033 = vsel %vm1032, %v1025, %v1029
    %v1034 = vand.u32 2147483647, %v1024
    %vm1035 = vcmp.eq.f32.partialorder %v1034, 8.507059e+37
    %v1036 = vand.u32 %v1024, 2147483648
    %v1037 = vor.u32 1.1754944e-38, %v1036
    %v1038 = vsel %vm1035, %v1037, %v1033
    %v1039 = vmul.f32 1.0, %v1038
    %v1040 = vtanh.pop %v1019
    %v1041 = vmul.f32 %v1039, %v916
    %1043 = vrot.lane.b32.xlu0 %v1040, 64
    %v1044 = vpop.permute.xlu0 %1043
    %v1046 = vmul.f32 %v1039, %v1044
    %1048 = vrot.lane.b32.xlu0 %v1046, 32
    %v1049 = vpop.permute.xlu0 %1048
    %v1051 = vadd.f32 %v1041, %v1049
    %v1052 = vtanh.pop %v1051
    %1054 = vrot.lane.b32.xlu0 %v1052, 64
    %v1055 = vpop.permute.xlu0 %1054
    %v1057 = vmul.f32 %v1039, %v1055
    %v1058 = vsel %vm114, %v991, 0
    %1060 = vmatpush.msra.mxu0 0.0
    %1061 = vmatpush.msra.mxu0 0.0
    %1062 = vmatpush.msra.mxu0 0.0
    %1063 = vmatpush.msra.mxu0 0.0
    %1064 = vmatpush.msra.mxu0 0.0
    %1065 = vmatpush.msra.mxu0 0.0
    %1066 = vmatpush.msra.mxu0 0.0
    %1067 = vmatpush.msra.mxu0 0.0
    %1068 = vmatpush.msra.mxu0 0.0
    %1069 = vmatpush.msra.mxu0 0.0
    %1070 = vmatpush.msra.mxu0 0.0
    %1071 = vmatpush.msra.mxu0 0.0
    %1072 = vmatpush.msra.mxu0 %v49
    %1073 = vmatpush.msra.mxu0 %v48
    %1074 = vmatpush.msra.mxu0 %v47
    %1075 = vmatpush.msra.mxu0 %v46
    %1076 = vmatmul.f32.gmra.mxu0 %v1058
    %v1077 = vpop.f32.mrf.mxu0
    %v1078 = vadd.f32 0.0, %v1077
    %1079 = vdwg.mxu0
    %v1081 = vrot.slane %v1078, 4
    %v1083 = vadd.f32 %v112, %v1081
    %v1084 = vxor.u32 %v1083, 2147483648
    %v1085 = vmul.f32 %v1084, 1.442695
    %v1086 = vpow.pop %v1085
    %v1087 = vadd.f32 %v1086, 1.0
    %v1088 = vrcp.pop %v1087
    %v1089 = vmul.f32 %v1087, %v1088
    %v1090 = vsub.f32 1.0, %v1089
    %v1091 = vmul.f32 %v1088, %v1090
    %v1092 = vadd.f32 %v1088, %v1091
    %vm1093 = vweird.f32 %v1087
    %vm1094 = vweird.f32 %v1088
    %vm1095 = vmor %vm1093, %vm1094
    %v1096 = vsel %vm1095, %v1088, %v1092
    %v1097 = vand.u32 2147483647, %v1087
    %vm1098 = vcmp.eq.f32.partialorder %v1097, 8.507059e+37
    %v1099 = vand.u32 %v1087, 2147483648
    %v1100 = vor.u32 1.1754944e-38, %v1099
    %v1101 = vsel %vm1098, %v1100, %v1096
    %v1102 = vmul.f32 1.0, %v1101
    %v1103 = vtanh.pop %v1083
    %v1105 = vrot.slane %v982, 4
    %v1107 = vmul.f32 %v1102, %v1105
    %1109 = vrot.lane.b32.xlu0 %v1103, 64
    %v1110 = vpop.permute.xlu0 %1109
    %v1112 = vmul.f32 %v1102, %v1110
    %1114 = vrot.lane.b32.xlu0 %v1112, 32
    %v1115 = vpop.permute.xlu0 %1114
    %v1117 = vadd.f32 %v1107, %v1115
    %v1118 = vtanh.pop %v1117
    %1120 = vrot.lane.b32.xlu0 %v1118, 64
    %v1121 = vpop.permute.xlu0 %1120
    %v1123 = vmul.f32 %v1102, %v1121
    %1125 = vrot.lane.b32.xlu0 %v1123, 32
    %v1126 = vpop.permute.xlu0 %1125
    %v1129 = vrot.slane %v1057, 4
    %1130 = vrot.lane.b32.xlu0 %v1129, 64
    %v1131 = vpop.permute.xlu0 %1130
    %v1133 = vsel %vm114, %v1126, %v1131
    %v1135 = vrot.slane %v1133, 4
    %v1136 = vsel %vm181, %v1135, 0
    %1138 = vmatpush.msra.mxu0 0.0
    %1139 = vmatpush.msra.mxu0 0.0
    %1140 = vmatpush.msra.mxu0 0.0
    %1141 = vmatpush.msra.mxu0 0.0
    %1142 = vmatpush.msra.mxu0 0.0
    %1143 = vmatpush.msra.mxu0 0.0
    %1144 = vmatpush.msra.mxu0 0.0
    %1145 = vmatpush.msra.mxu0 0.0
    %1146 = vmatpush.msra.mxu0 %v57
    %1147 = vmatpush.msra.mxu0 %v56
    %1148 = vmatpush.msra.mxu0 %v55
    %1149 = vmatpush.msra.mxu0 %v54
    %1150 = vmatpush.msra.mxu0 %v53
    %1151 = vmatpush.msra.mxu0 %v52
    %1152 = vmatpush.msra.mxu0 %v51
    %1153 = vmatpush.msra.mxu0 %v50
    %1154 = vmatmul.f32.gmra.mxu0 %v1136
    %v1155 = vpop.f32.mrf.mxu0
    %v1156 = vadd.f32 %v60, %v1155
    %1157 = vdwg.mxu0
    %v1158 = vxor.u32 %v1156, 2147483648
    %v1159 = vmul.f32 %v1158, 1.442695
    %v1160 = vpow.pop %v1159
    %v1161 = vadd.f32 %v1160, 1.0
    %v1162 = vrcp.pop %v1161
    %v1163 = vmul.f32 %v1161, %v1162
    %v1164 = vsub.f32 1.0, %v1163
    %v1165 = vmul.f32 %v1162, %v1164
    %v1166 = vadd.f32 %v1162, %v1165
    %vm1167 = vweird.f32 %v1161
    %vm1168 = vweird.f32 %v1162
    %vm1169 = vmor %vm1167, %vm1168
    %v1170 = vsel %vm1169, %v1162, %v1166
    %v1171 = vand.u32 2147483647, %v1161
    %vm1172 = vcmp.eq.f32.partialorder %v1171, 8.507059e+37
    %v1173 = vand.u32 %v1161, 2147483648
    %v1174 = vor.u32 1.1754944e-38, %v1173
    %v1175 = vsel %vm1172, %v1174, %v1170
    %v1176 = vmul.f32 1.0, %v1175
    %v1177 = vtanh.pop %v1156
    %v1178 = vmul.f32 %v1176, %v1051
    %1180 = vrot.lane.b32.xlu0 %v1177, 64
    %v1181 = vpop.permute.xlu0 %1180
    %v1183 = vmul.f32 %v1176, %v1181
    %1185 = vrot.lane.b32.xlu0 %v1183, 32
    %v1186 = vpop.permute.xlu0 %1185
    %v1188 = vadd.f32 %v1178, %v1186
    %v1189 = vtanh.pop %v1188
    %1191 = vrot.lane.b32.xlu0 %v1189, 64
    %v1192 = vpop.permute.xlu0 %1191
    %v1194 = vmul.f32 %v1176, %v1192
    %v1195 = vld [vmem:[%s6] sm:$0xff]
    %v1196 = vld [vmem:[%s6 + $0x8] sm:$0xff]
    %v1197 = vld [vmem:[%s6 + $0x10] sm:$0xff]
    %v1198 = vld [vmem:[%s6 + $0x18] sm:$0xff]
    %v1199 = vld [vmem:[%s7] sm:$0x1]
    %v1201 = vperm.slane %v1199, 0
    %1204 = vrot.lane.b32.xlu0 %v1194, 32
    %v1205 = vpop.permute.xlu0 %1204
    %v1206 = vsel %vm114, %v1205, 0
    %1208 = vmatpush.msra.mxu0 0.0
    %1209 = vmatpush.msra.mxu0 0.0
    %1210 = vmatpush.msra.mxu0 0.0
    %1211 = vmatpush.msra.mxu0 0.0
    %1212 = vmatpush.msra.mxu0 0.0
    %1213 = vmatpush.msra.mxu0 0.0
    %1214 = vmatpush.msra.mxu0 0.0
    %1215 = vmatpush.msra.mxu0 0.0
    %1216 = vmatpush.msra.mxu0 0.0
    %1217 = vmatpush.msra.mxu0 0.0
    %1218 = vmatpush.msra.mxu0 0.0
    %1219 = vmatpush.msra.mxu0 0.0
    %1220 = vmatpush.msra.mxu0 %v1198
    %1221 = vmatpush.msra.mxu0 %v1197
    %1222 = vmatpush.msra.mxu0 %v1196
    %1223 = vmatpush.msra.mxu0 %v1195
    %1224 = vmatmul.f32.gmra.mxu0 %v1206
    %v1225 = vpop.f32.mrf.mxu0
    %v1226 = vadd.f32 %v1201, %v1225
    %1227 = vdwg.mxu0
    %vm1228 = vcmask 60416
    %1229 = vst.msk [vmem:[#allocation5] sm:$0xf] %vm1228, %v1226
    // Predicated region
    $region38: #{attack_predictor_forward.1} parent=1 // pred_check
      _
    $region39: #{attack_predictor_forward.1} parent=1 // pred_check_branch
      %1231 = sbr.rel (0) target = $region41
    $region40: #{attack_predictor_forward.1} parent=1 // pred_region
      %1233 = vsyncadd [#allocation4], 0
      %s1235 = sshll.u32 [#allocation5], 4
      %s1236 = int_to_ptr.vmem [resolvable:$true] %s1235
      %s1237 = sshll.u32 %s8, 4
      %s1238 = int_to_ptr.hbm [resolvable:$true] %s1237
      %1240 = dma.vmem_to_hbm [thread:$0]  %s1236, 64, %s1238, [#allocation4]
    $region41: #{attack_predictor_forward.1} parent=1 // pred_fallthru
      _
    // Predicated region
    $region42: #{attack_predictor_forward.1} parent=1 // pred_check
      _
    $region43: #{attack_predictor_forward.1} parent=1 // pred_check_branch
      %1242 = sbr.rel (0) target = $region45
    $region44: #{attack_predictor_forward.1} parent=1 // pred_region
      %1244 = dma.done [#allocation4], 64
    $region45: #{attack_predictor_forward.1} parent=1 // pred_fallthru
      _
    %1245 = vsyncpa [#allocation3], 1
    %1246 = vsyncpa [#allocation4], 1

</llo_original>
